<compile_context>
chip_gen: v6e
topology: v6e:2x2x1
jax: 0.10.0
libtpu: 0.0.40
codegen_flags: <defaults>
</compile_context>

<pallas_src>
import functools

import jax
import jax.numpy as jnp
from jax import lax
from jax.experimental import pallas as pl
from jax.experimental.pallas import tpu as pltpu

_LANE = 128
_NEG = -1e30  # padded tag-logit bias; exp underflows to exactly 0


def _round_up(n, m):
    return ((n + m - 1) // m) * m


def lstm_tagger_kernel(x_ref, wih_ref, whh_ref, b_ref, wtag_ref, btag_ref,
                       out_ref, xg_scr, hs_scr, *, seq, bblk):
    """One tile of `bblk` sentences, everything resident in VMEM.

    x_ref:    (seq*bblk, E)    embedded tokens, row = t*bblk + b (MXU dtype)
    wih_ref:  (E, 4*Hp)        input->hidden, gates packed [i,f,o,g] (MXU dtype)
    whh_ref:  (Hp, 4*Hp)       hidden->hidden, gates packed [i,f,o,g] (MXU dtype)
    b_ref:    (1, 4*Hp)        b_ih + b_hh, f32 (padded lanes = 0)
    wtag_ref: (Hp, Tp)         hidden2tag weights (MXU dtype, zero padded)
    btag_ref: (1, Tp)          hidden2tag bias, f32 (padded lanes = -1e30)
    out_ref:  (seq*bblk, Tp)   log-softmax tag scores, f32, lane-dense
    xg_scr:   (seq*bblk, 4*Hp) f32, hoisted input projection
    hs_scr:   (seq*bblk, Hp)   f32, per-step hidden states
    """
    Hp = whh_ref.shape[0]
    mxu_dt = whh_ref.dtype

    # ---- Hoisted input projection: one batched MXU matmul for all (t, b) ----
    xg_scr[...] = (jnp.dot(x_ref[...], wih_ref[...],
                           preferred_element_type=jnp.float32)
                   + b_ref[...])                                # (R, 4Hp) f32

    whh = whh_ref[...]                                          # loop-invariant

    # ---- Sequential recurrence: only h @ W_hh on the critical path ----------
    def step(t, carry):
        h, c = carry                                            # (bblk, Hp) f32
        r0 = pl.multiple_of(t * bblk, bblk)
        gates = xg_scr[pl.ds(r0, bblk), :] + jnp.dot(
            h.astype(mxu_dt), whh, preferred_element_type=jnp.float32)

        # Gates packed [i, f, o, g]: one sigmoid over a contiguous 3*Hp slab,
        # one tanh over the last Hp lanes (2 EUP issues/step instead of 4).
        sig = jax.nn.sigmoid(gates[:, :3 * Hp])
        i_g = sig[:, 0 * Hp:1 * Hp]
        f_g = sig[:, 1 * Hp:2 * Hp]
        o_g = sig[:, 2 * Hp:3 * Hp]
        g_g = jnp.tanh(gates[:, 3 * Hp:])

        c_new = f_g * c + i_g * g_g
        h_new = o_g * jnp.tanh(c_new)
        hs_scr[pl.ds(r0, bblk), :] = h_new
        return h_new, c_new

    h0 = jnp.zeros((bblk, Hp), jnp.float32)
    c0 = jnp.zeros((bblk, Hp), jnp.float32)
    unroll = True if seq <= 16 else 8   # bounded unroll for long sequences
    lax.fori_loop(0, seq, step, (h0, c0), unroll=unroll)

    # ---- Batched tag projection + log_softmax epilogue ----------------------
    tag = (jnp.dot(hs_scr[...].astype(mxu_dt), wtag_ref[...],
                   preferred_element_type=jnp.float32)
           + btag_ref[...])                                     # (R, Tp) f32
    m = jnp.max(tag, axis=1, keepdims=True)
    z = tag - m
    lse = jnp.log(jnp.sum(jnp.exp(z), axis=1, keepdims=True))
    out_ref[...] = z - lse                                      # dense store


def prepare_params(params, mxu_dtype=jnp.bfloat16):
    """One-time weight prep (hoisted out of the per-call forward path).

    Transposes to row-major-in / gate-major-out, reorders gates from PyTorch's
    [i, f, g, o] to [i, f, o, g], and pads:
      * hidden dim H -> Hp (multiple of 32, so 4*Hp is lane aligned; H=32
        means no padding at all and the gate block is exactly 128 lanes),
      * tag dim T -> Tp (multiple of 128, lane-dense output slab).
    MXU operands are cast to `mxu_dtype` (bf16 on v6e/v7x, f32 if desired);
    biases stay f32.
    """
    f32 = jnp.float32
    emb = params["embedding"]
    w_ih, w_hh = params["w_ih"], params["w_hh"]
    b_ih, b_hh = params["b_ih"], params["b_hh"]
    w_tag, b_tag = params["w_tag"], params["b_tag"]

    E = emb.shape[1]
    H = w_hh.shape[1]
    T = w_tag.shape[0]
    Hp = _round_up(H, 32)
    Tp = _round_up(T, _LANE)

    order = (0, 1, 3, 2)  # PyTorch gate blocks [i,f,g,o] -> kernel [i,f,o,g]

    wih_g = w_ih.astype(f32).reshape(4, H, E)
    wih_g = jnp.stack([wih_g[k] for k in order])                # (4, Hout, E)
    wih_g = jnp.pad(wih_g, ((0, 0), (0, Hp - H), (0, 0)))       # (4, Hp, E)
    wih_p = jnp.transpose(wih_g, (2, 0, 1)).reshape(E, 4 * Hp)  # (E, 4Hp)

    whh_g = w_hh.astype(f32).reshape(4, H, H)
    whh_g = jnp.stack([whh_g[k] for k in order])                # (4, Hout, Hin)
    whh_g = jnp.pad(whh_g, ((0, 0), (0, Hp - H), (0, Hp - H)))  # (4, Hp, Hp)
    whh_p = jnp.transpose(whh_g, (2, 0, 1)).reshape(Hp, 4 * Hp)  # (Hin, 4Hp)

    b = (b_ih + b_hh).astype(f32).reshape(4, H)
    b = jnp.stack([b[k] for k in order])
    b_p = jnp.pad(b, ((0, 0), (0, Hp - H))).reshape(1, 4 * Hp)  # f32, pad = 0

    wtag_p = jnp.pad(jnp.transpose(w_tag).astype(f32),
                     ((0, Hp - H), (0, Tp - T)))                # (Hp, Tp)
    btag_p = jnp.concatenate(
        [b_tag.astype(f32), jnp.full((Tp - T,), _NEG, f32)]).reshape(1, Tp)

    return {
        "embedding": emb.astype(mxu_dtype),
        "wih": wih_p.astype(mxu_dtype),
        "whh": whh_p.astype(mxu_dtype),
        "b": b_p,                       # stays f32
        "wtag": wtag_p.astype(mxu_dtype),
        "btag": btag_p,                 # stays f32 (-1e30 pad)
        "dims": (E, H, Hp, T, Tp),
    }


def lstm_tagger_forward(sentences, prepped, *, batch_block=8):
    """Forward for one sentence (seq,) or a batch (B, seq) of sentences.

    `batch_block` sentences are processed per grid step (>=8 fills the vreg
    sublanes; raise to 128/256 for large batches to fill the MXU rows).
    """
    assert batch_block % 8 == 0
    single = sentences.ndim == 1
    if single:
        sentences = sentences[None, :]
    B, seq = sentences.shape

    E, H, Hp, T, Tp = prepped["dims"]
    G = 4 * Hp
    f32 = jnp.float32

    Bp = _round_up(B, batch_block)
    nb = Bp // batch_block
    R = seq * batch_block

    # TODO(synk): embedding lookup stays as an XLA gather; a scalar-prefetch
    # DMA-gather Pallas kernel could fuse it for very long sequences.
    sent_p = jnp.pad(sentences, ((0, Bp - B), (0, 0)))
    x = prepped["embedding"][sent_p]                            # (Bp, seq, E)
    # Row order inside each batch tile is (t, b) so the per-step slice in the
    # kernel is a contiguous (batch_block, E) slab at row t*batch_block.
    x = x.reshape(nb, batch_block, seq, E).transpose(0, 2, 1, 3)
    x = x.reshape(nb, R, E)

    kernel = functools.partial(lstm_tagger_kernel, seq=seq, bblk=batch_block)

    out = pl.pallas_call(
        kernel,
        out_shape=jax.ShapeDtypeStruct((nb, R, Tp), f32),
        grid_spec=pltpu.PrefetchScalarGridSpec(
            num_scalar_prefetch=0,
            grid=(nb,),
            in_specs=[
                pl.BlockSpec((None, R, E), lambda i: (i, 0, 0)),
                pl.BlockSpec((E, G), lambda i: (0, 0)),
                pl.BlockSpec((Hp, G), lambda i: (0, 0)),
                pl.BlockSpec((1, G), lambda i: (0, 0)),
                pl.BlockSpec((Hp, Tp), lambda i: (0, 0)),
                pl.BlockSpec((1, Tp), lambda i: (0, 0)),
            ],
            out_specs=pl.BlockSpec((None, R, Tp), lambda i: (i, 0, 0)),
            # NOTE: scratch grows linearly with seq*batch_block; for very long
            # sequences chunk the hoisted projection/epilogue over a seq grid
            # axis or raise vmem_limit_bytes (v7x has only 64 MiB VMEM).
            scratch_shapes=[
                pltpu.VMEM((R, G), f32),    # hoisted input projection
                pltpu.VMEM((R, Hp), f32),   # per-step hidden states
            ],
        ),
        compiler_params=pltpu.CompilerParams(
            # Batch tiles are independent -> sharded across both TensorCores
            # on v7x; harmless no-op on v5e/v6e.
            dimension_semantics=("parallel",)),
    )(x, prepped["wih"], prepped["whh"], prepped["b"],
      prepped["wtag"], prepped["btag"])

    out = out.reshape(nb, seq, batch_block, Tp).transpose(0, 2, 1, 3)
    out = out.reshape(Bp, seq, Tp)[:B, :, :T]
    return out[0] if single else out


def init_params(key, vocab_size, embedding_dim, hidden_dim, tagset_size):
    """Deterministic init (uniform(-1/sqrt(H), 1/sqrt(H)) like PyTorch)."""
    ks = jax.random.split(key, 7)
    H = hidden_dim
    bound = 1.0 / jnp.sqrt(jnp.float32(H))
    u = lambda k, shape, b: jax.random.uniform(k, shape, jnp.float32, -b, b)
    return {
        "embedding": jax.random.normal(ks[0], (vocab_size, embedding_dim),
                                       jnp.float32),
        "w_ih": u(ks[1], (4 * H, embedding_dim), bound),
        "w_hh": u(ks[2], (4 * H, H), bound),
        "b_ih": u(ks[3], (4 * H,), bound),
        "b_hh": u(ks[4], (4 * H,), bound),
        "w_tag": u(ks[5], (tagset_size, H), bound),
        "b_tag": u(ks[6], (tagset_size,), bound),
    }


def reference_forward(sentence, params):
    """Pure-JAX reference (mirrors PyTorch LSTMTagger.forward)."""
    emb = params["embedding"][sentence]
    H = params["w_hh"].shape[1]
    w_ih, w_hh = params["w_ih"], params["w_hh"]
    b = params["b_ih"] + params["b_hh"]

    def step(carry, x_t):
        h, c = carry
        gates = x_t @ w_ih.T + h @ w_hh.T + b
        i = jax.nn.sigmoid(gates[0:H])
        f = jax.nn.sigmoid(gates[H:2 * H])
        g = jnp.tanh(gates[2 * H:3 * H])
        o = jax.nn.sigmoid(gates[3 * H:4 * H])
        c_new = f * c + i * g
        h_new = o * jnp.tanh(c_new)
        return (h_new, c_new), h_new

    init = (jnp.zeros((H,), jnp.float32), jnp.zeros((H,), jnp.float32))
    _, hs = lax.scan(step, init, emb)
    tag_space = hs @ params["w_tag"].T + params["b_tag"]
    return jax.nn.log_softmax(tag_space, axis=1)


if __name__ == "__main__":
    vocab_size = 100
    embedding_dim = 32
    hidden_dim = 32
    tagset_size = 8
    seq_len = 8
    batch = 16

    key = jax.random.PRNGKey(0)
    k_param, k_sent, k_batch = jax.random.split(key, 3)
    params = init_params(k_param, vocab_size, embedding_dim, hidden_dim,
                         tagset_size)

    # ---- single sentence (module's original interface), f32 MXU operands ----
    sentence = jax.random.randint(k_sent, (seq_len,), 0, vocab_size,
                                  dtype=jnp.int32)
    prepped_f32 = prepare_params(params, mxu_dtype=jnp.float32)
    out_single = jax.block_until_ready(
        lstm_tagger_forward(sentence, prepped_f32))
    ref_single = reference_forward(sentence, params)
    assert out_single.shape == (seq_len, tagset_size)
    assert jnp.allclose(out_single, ref_single, atol=1e-4, rtol=1e-4)

    # ---- batched sentences, bf16 MXU operands (v6e/v7x fast path) -----------
    sentences = jax.random.randint(k_batch, (batch, seq_len), 0, vocab_size,
                                   dtype=jnp.int32)
    prepped_bf16 = prepare_params(params, mxu_dtype=jnp.bfloat16)
    out_batch = jax.block_until_ready(
        lstm_tagger_forward(sentences, prepped_bf16, batch_block=8))
    ref_batch = jax.vmap(lambda s: reference_forward(s, params))(sentences)
    assert out_batch.shape == (batch, seq_len, tagset_size)
    # bf16 MXU operands with f32 accumulation/gating -> mixed-precision tol.
    assert jnp.allclose(out_batch, ref_batch, atol=5e-2, rtol=5e-2)

    print("KERNEL_OK")
</pallas_src>

<mosaic_0001>
module attributes {stable_mosaic.version = 11 : i64} {
  func.func @lstm_tagger_kernel(%arg0: i32, %arg1: memref<1x64x32xf32, #tpu.memory_space<vmem>>, %arg2: memref<32x128xf32, #tpu.memory_space<vmem>>, %arg3: memref<32x128xf32, #tpu.memory_space<vmem>>, %arg4: memref<1x128xf32, #tpu.memory_space<vmem>>, %arg5: memref<32x128xf32, #tpu.memory_space<vmem>>, %arg6: memref<1x128xf32, #tpu.memory_space<vmem>>, %arg7: memref<1x64x128xf32, #tpu.memory_space<vmem>>, %arg8: memref<64x128xf32, #tpu.memory_space<vmem>>, %arg9: memref<64x32xf32, #tpu.memory_space<vmem>>) attributes {dimension_semantics = [#tpu.dimension_semantics<parallel>], iteration_bounds = array<i64: 1>, scalar_prefetch = 0 : i64, scratch_operands = 2 : i64, tpu.core_type = #tpu.core_type<tc>, window_params = [{transform_indices = @transform_0, window_bounds = array<i64: 1, 64, 32>}, {pipeline_mode = #tpu.pipeline_mode<synchronous>, transform_indices = @transform_1, window_bounds = array<i64: 32, 128>}, {pipeline_mode = #tpu.pipeline_mode<synchronous>, transform_indices = @transform_2, window_bounds = array<i64: 32, 128>}, {pipeline_mode = #tpu.pipeline_mode<synchronous>, transform_indices = @transform_3, window_bounds = array<i64: 1, 128>}, {pipeline_mode = #tpu.pipeline_mode<synchronous>, transform_indices = @transform_4, window_bounds = array<i64: 32, 128>}, {pipeline_mode = #tpu.pipeline_mode<synchronous>, transform_indices = @transform_5, window_bounds = array<i64: 1, 128>}, {transform_indices = @transform_6, window_bounds = array<i64: 1, 64, 128>}]} {
    %c0 = arith.constant 0 : index
    %c0_0 = arith.constant 0 : index
    %c0_1 = arith.constant 0 : index
    %0 = vector.load %arg1[%c0, %c0_0, %c0_1] : memref<1x64x32xf32, #tpu.memory_space<vmem>>, vector<1x64x32xf32>
    %1 = vector.shape_cast %0 : vector<1x64x32xf32> to vector<64x32xf32>
    %c0_2 = arith.constant 0 : index
    %c0_3 = arith.constant 0 : index
    %2 = vector.load %arg2[%c0_2, %c0_3] : memref<32x128xf32, #tpu.memory_space<vmem>>, vector<32x128xf32>
    %cst = arith.constant dense<0.000000e+00> : vector<64x128xf32>
    %3 = tpu.matmul %1, %2, %cst {dimension_numbers = #tpu.dot_dimension_numbers<[1], [0], [0], [1], [0, 0, 1, 1], [], []>} : vector<64x32xf32>, vector<32x128xf32>, vector<64x128xf32> -> vector<64x128xf32>
    %c0_4 = arith.constant 0 : index
    %c0_5 = arith.constant 0 : index
    %4 = vector.load %arg4[%c0_4, %c0_5] : memref<1x128xf32, #tpu.memory_space<vmem>>, vector<1x128xf32>
    %5 = vector.broadcast %4 : vector<1x128xf32> to vector<64x128xf32>
    %6 = arith.addf %3, %5 : vector<64x128xf32>
    %c0_6 = arith.constant 0 : index
    %c0_7 = arith.constant 0 : index
    %7 = vector.load %arg8[%c0_6, %c0_7] : memref<64x128xf32, #tpu.memory_space<vmem>>, vector<64x128xf32>
    tpu.vector_store %arg8[%c0_6, %c0_7], %6 {strides = array<i32>} : memref<64x128xf32, #tpu.memory_space<vmem>>, vector<64x128xf32>,
    %c0_8 = arith.constant 0 : index
    %c0_9 = arith.constant 0 : index
    %8 = vector.load %arg3[%c0_8, %c0_9] : memref<32x128xf32, #tpu.memory_space<vmem>>, vector<32x128xf32>
    %cst_10 = arith.constant 0.000000e+00 : f32
    %9 = vector.broadcast %cst_10 : f32 to vector<8x32xf32>
    %cst_11 = arith.constant 0.000000e+00 : f32
    %10 = vector.broadcast %cst_11 : f32 to vector<8x32xf32>
    %c0_i32 = arith.constant 0 : i32
    %c8_i32 = arith.constant 8 : i32
    %11 = arith.muli %c0_i32, %c8_i32 : i32
    %12 = tpu.assume_multiple %11, 8 : i32
    %13 = arith.index_cast %12 : i32 to index
    %c0_12 = arith.constant 0 : index
    %14 = vector.load %arg8[%13, %c0_12] : memref<64x128xf32, #tpu.memory_space<vmem>>, vector<8x128xf32>
    %cst_13 = arith.constant dense<0.000000e+00> : vector<8x128xf32>
    %15 = tpu.matmul %9, %8, %cst_13 {dimension_numbers = #tpu.dot_dimension_numbers<[1], [0], [0], [1], [0, 0, 1, 1], [], []>} : vector<8x32xf32>, vector<32x128xf32>, vector<8x128xf32> -> vector<8x128xf32>
    %16 = arith.addf %14, %15 : vector<8x128xf32>
    %17 = vector.extract_strided_slice %16 {offsets = [0, 0], sizes = [8, 96], strides = [1, 1]} : vector<8x128xf32> to vector<8x96xf32>
    %18 = arith.negf %17 : vector<8x96xf32>
    %19 = math.exp %18 : vector<8x96xf32>
    %cst_14 = arith.constant 1.000000e+00 : f32
    %20 = vector.broadcast %cst_14 : f32 to vector<8x96xf32>
    %21 = arith.addf %20, %19 : vector<8x96xf32>
    %22 = arith.divf %20, %21 : vector<8x96xf32>
    %23 = vector.extract_strided_slice %22 {offsets = [0, 0], sizes = [8, 32], strides = [1, 1]} : vector<8x96xf32> to vector<8x32xf32>
    %24 = vector.extract_strided_slice %22 {offsets = [0, 32], sizes = [8, 32], strides = [1, 1]} : vector<8x96xf32> to vector<8x32xf32>
    %25 = vector.extract_strided_slice %22 {offsets = [0, 64], sizes = [8, 32], strides = [1, 1]} : vector<8x96xf32> to vector<8x32xf32>
    %26 = vector.extract_strided_slice %16 {offsets = [0, 96], sizes = [8, 32], strides = [1, 1]} : vector<8x128xf32> to vector<8x32xf32>
    %27 = math.tanh %26 : vector<8x32xf32>
    %28 = arith.mulf %24, %10 : vector<8x32xf32>
    %29 = arith.mulf %23, %27 : vector<8x32xf32>
    %30 = arith.addf %28, %29 : vector<8x32xf32>
    %31 = math.tanh %30 : vector<8x32xf32>
    %32 = arith.mulf %25, %31 : vector<8x32xf32>
    %33 = arith.index_cast %12 : i32 to index
    %c0_15 = arith.constant 0 : index
    %34 = vector.load %arg9[%33, %c0_15] : memref<64x32xf32, #tpu.memory_space<vmem>>, vector<8x32xf32>
    tpu.vector_store %arg9[%33, %c0_15], %32 {strides = array<i32>} : memref<64x32xf32, #tpu.memory_space<vmem>>, vector<8x32xf32>,
    %c1_i32 = arith.constant 1 : i32
    %c8_i32_16 = arith.constant 8 : i32
    %35 = arith.muli %c1_i32, %c8_i32_16 : i32
    %36 = tpu.assume_multiple %35, 8 : i32
    %37 = arith.index_cast %36 : i32 to index
    %c0_17 = arith.constant 0 : index
    %38 = vector.load %arg8[%37, %c0_17] : memref<64x128xf32, #tpu.memory_space<vmem>>, vector<8x128xf32>
    %cst_18 = arith.constant dense<0.000000e+00> : vector<8x128xf32>
    %39 = tpu.matmul %32, %8, %cst_18 {dimension_numbers = #tpu.dot_dimension_numbers<[1], [0], [0], [1], [0, 0, 1, 1], [], []>} : vector<8x32xf32>, vector<32x128xf32>, vector<8x128xf32> -> vector<8x128xf32>
    %40 = arith.addf %38, %39 : vector<8x128xf32>
    %41 = vector.extract_strided_slice %40 {offsets = [0, 0], sizes = [8, 96], strides = [1, 1]} : vector<8x128xf32> to vector<8x96xf32>
    %42 = arith.negf %41 : vector<8x96xf32>
    %43 = math.exp %42 : vector<8x96xf32>
    %cst_19 = arith.constant 1.000000e+00 : f32
    %44 = vector.broadcast %cst_19 : f32 to vector<8x96xf32>
    %45 = arith.addf %44, %43 : vector<8x96xf32>
    %46 = arith.divf %44, %45 : vector<8x96xf32>
    %47 = vector.extract_strided_slice %46 {offsets = [0, 0], sizes = [8, 32], strides = [1, 1]} : vector<8x96xf32> to vector<8x32xf32>
    %48 = vector.extract_strided_slice %46 {offsets = [0, 32], sizes = [8, 32], strides = [1, 1]} : vector<8x96xf32> to vector<8x32xf32>
    %49 = vector.extract_strided_slice %46 {offsets = [0, 64], sizes = [8, 32], strides = [1, 1]} : vector<8x96xf32> to vector<8x32xf32>
    %50 = vector.extract_strided_slice %40 {offsets = [0, 96], sizes = [8, 32], strides = [1, 1]} : vector<8x128xf32> to vector<8x32xf32>
    %51 = math.tanh %50 : vector<8x32xf32>
    %52 = arith.mulf %48, %30 : vector<8x32xf32>
    %53 = arith.mulf %47, %51 : vector<8x32xf32>
    %54 = arith.addf %52, %53 : vector<8x32xf32>
    %55 = math.tanh %54 : vector<8x32xf32>
    %56 = arith.mulf %49, %55 : vector<8x32xf32>
    %57 = arith.index_cast %36 : i32 to index
    %c0_20 = arith.constant 0 : index
    %58 = vector.load %arg9[%57, %c0_20] : memref<64x32xf32, #tpu.memory_space<vmem>>, vector<8x32xf32>
    tpu.vector_store %arg9[%57, %c0_20], %56 {strides = array<i32>} : memref<64x32xf32, #tpu.memory_space<vmem>>, vector<8x32xf32>,
    %c2_i32 = arith.constant 2 : i32
    %c8_i32_21 = arith.constant 8 : i32
    %59 = arith.muli %c2_i32, %c8_i32_21 : i32
    %60 = tpu.assume_multiple %59, 8 : i32
    %61 = arith.index_cast %60 : i32 to index
    %c0_22 = arith.constant 0 : index
    %62 = vector.load %arg8[%61, %c0_22] : memref<64x128xf32, #tpu.memory_space<vmem>>, vector<8x128xf32>
    %cst_23 = arith.constant dense<0.000000e+00> : vector<8x128xf32>
    %63 = tpu.matmul %56, %8, %cst_23 {dimension_numbers = #tpu.dot_dimension_numbers<[1], [0], [0], [1], [0, 0, 1, 1], [], []>} : vector<8x32xf32>, vector<32x128xf32>, vector<8x128xf32> -> vector<8x128xf32>
    %64 = arith.addf %62, %63 : vector<8x128xf32>
    %65 = vector.extract_strided_slice %64 {offsets = [0, 0], sizes = [8, 96], strides = [1, 1]} : vector<8x128xf32> to vector<8x96xf32>
    %66 = arith.negf %65 : vector<8x96xf32>
    %67 = math.exp %66 : vector<8x96xf32>
    %cst_24 = arith.constant 1.000000e+00 : f32
    %68 = vector.broadcast %cst_24 : f32 to vector<8x96xf32>
    %69 = arith.addf %68, %67 : vector<8x96xf32>
    %70 = arith.divf %68, %69 : vector<8x96xf32>
    %71 = vector.extract_strided_slice %70 {offsets = [0, 0], sizes = [8, 32], strides = [1, 1]} : vector<8x96xf32> to vector<8x32xf32>
    %72 = vector.extract_strided_slice %70 {offsets = [0, 32], sizes = [8, 32], strides = [1, 1]} : vector<8x96xf32> to vector<8x32xf32>
    %73 = vector.extract_strided_slice %70 {offsets = [0, 64], sizes = [8, 32], strides = [1, 1]} : vector<8x96xf32> to vector<8x32xf32>
    %74 = vector.extract_strided_slice %64 {offsets = [0, 96], sizes = [8, 32], strides = [1, 1]} : vector<8x128xf32> to vector<8x32xf32>
    %75 = math.tanh %74 : vector<8x32xf32>
    %76 = arith.mulf %72, %54 : vector<8x32xf32>
    %77 = arith.mulf %71, %75 : vector<8x32xf32>
    %78 = arith.addf %76, %77 : vector<8x32xf32>
    %79 = math.tanh %78 : vector<8x32xf32>
    %80 = arith.mulf %73, %79 : vector<8x32xf32>
    %81 = arith.index_cast %60 : i32 to index
    %c0_25 = arith.constant 0 : index
    %82 = vector.load %arg9[%81, %c0_25] : memref<64x32xf32, #tpu.memory_space<vmem>>, vector<8x32xf32>
    tpu.vector_store %arg9[%81, %c0_25], %80 {strides = array<i32>} : memref<64x32xf32, #tpu.memory_space<vmem>>, vector<8x32xf32>,
    %c3_i32 = arith.constant 3 : i32
    %c8_i32_26 = arith.constant 8 : i32
    %83 = arith.muli %c3_i32, %c8_i32_26 : i32
    %84 = tpu.assume_multiple %83, 8 : i32
    %85 = arith.index_cast %84 : i32 to index
    %c0_27 = arith.constant 0 : index
    %86 = vector.load %arg8[%85, %c0_27] : memref<64x128xf32, #tpu.memory_space<vmem>>, vector<8x128xf32>
    %cst_28 = arith.constant dense<0.000000e+00> : vector<8x128xf32>
    %87 = tpu.matmul %80, %8, %cst_28 {dimension_numbers = #tpu.dot_dimension_numbers<[1], [0], [0], [1], [0, 0, 1, 1], [], []>} : vector<8x32xf32>, vector<32x128xf32>, vector<8x128xf32> -> vector<8x128xf32>
    %88 = arith.addf %86, %87 : vector<8x128xf32>
    %89 = vector.extract_strided_slice %88 {offsets = [0, 0], sizes = [8, 96], strides = [1, 1]} : vector<8x128xf32> to vector<8x96xf32>
    %90 = arith.negf %89 : vector<8x96xf32>
    %91 = math.exp %90 : vector<8x96xf32>
    %cst_29 = arith.constant 1.000000e+00 : f32
    %92 = vector.broadcast %cst_29 : f32 to vector<8x96xf32>
    %93 = arith.addf %92, %91 : vector<8x96xf32>
    %94 = arith.divf %92, %93 : vector<8x96xf32>
    %95 = vector.extract_strided_slice %94 {offsets = [0, 0], sizes = [8, 32], strides = [1, 1]} : vector<8x96xf32> to vector<8x32xf32>
    %96 = vector.extract_strided_slice %94 {offsets = [0, 32], sizes = [8, 32], strides = [1, 1]} : vector<8x96xf32> to vector<8x32xf32>
    %97 = vector.extract_strided_slice %94 {offsets = [0, 64], sizes = [8, 32], strides = [1, 1]} : vector<8x96xf32> to vector<8x32xf32>
    %98 = vector.extract_strided_slice %88 {offsets = [0, 96], sizes = [8, 32], strides = [1, 1]} : vector<8x128xf32> to vector<8x32xf32>
    %99 = math.tanh %98 : vector<8x32xf32>
    %100 = arith.mulf %96, %78 : vector<8x32xf32>
    %101 = arith.mulf %95, %99 : vector<8x32xf32>
    %102 = arith.addf %100, %101 : vector<8x32xf32>
    %103 = math.tanh %102 : vector<8x32xf32>
    %104 = arith.mulf %97, %103 : vector<8x32xf32>
    %105 = arith.index_cast %84 : i32 to index
    %c0_30 = arith.constant 0 : index
    %106 = vector.load %arg9[%105, %c0_30] : memref<64x32xf32, #tpu.memory_space<vmem>>, vector<8x32xf32>
    tpu.vector_store %arg9[%105, %c0_30], %104 {strides = array<i32>} : memref<64x32xf32, #tpu.memory_space<vmem>>, vector<8x32xf32>,
    %c4_i32 = arith.constant 4 : i32
    %c8_i32_31 = arith.constant 8 : i32
    %107 = arith.muli %c4_i32, %c8_i32_31 : i32
    %108 = tpu.assume_multiple %107, 8 : i32
    %109 = arith.index_cast %108 : i32 to index
    %c0_32 = arith.constant 0 : index
    %110 = vector.load %arg8[%109, %c0_32] : memref<64x128xf32, #tpu.memory_space<vmem>>, vector<8x128xf32>
    %cst_33 = arith.constant dense<0.000000e+00> : vector<8x128xf32>
    %111 = tpu.matmul %104, %8, %cst_33 {dimension_numbers = #tpu.dot_dimension_numbers<[1], [0], [0], [1], [0, 0, 1, 1], [], []>} : vector<8x32xf32>, vector<32x128xf32>, vector<8x128xf32> -> vector<8x128xf32>
    %112 = arith.addf %110, %111 : vector<8x128xf32>
    %113 = vector.extract_strided_slice %112 {offsets = [0, 0], sizes = [8, 96], strides = [1, 1]} : vector<8x128xf32> to vector<8x96xf32>
    %114 = arith.negf %113 : vector<8x96xf32>
    %115 = math.exp %114 : vector<8x96xf32>
    %cst_34 = arith.constant 1.000000e+00 : f32
    %116 = vector.broadcast %cst_34 : f32 to vector<8x96xf32>
    %117 = arith.addf %116, %115 : vector<8x96xf32>
    %118 = arith.divf %116, %117 : vector<8x96xf32>
    %119 = vector.extract_strided_slice %118 {offsets = [0, 0], sizes = [8, 32], strides = [1, 1]} : vector<8x96xf32> to vector<8x32xf32>
    %120 = vector.extract_strided_slice %118 {offsets = [0, 32], sizes = [8, 32], strides = [1, 1]} : vector<8x96xf32> to vector<8x32xf32>
    %121 = vector.extract_strided_slice %118 {offsets = [0, 64], sizes = [8, 32], strides = [1, 1]} : vector<8x96xf32> to vector<8x32xf32>
    %122 = vector.extract_strided_slice %112 {offsets = [0, 96], sizes = [8, 32], strides = [1, 1]} : vector<8x128xf32> to vector<8x32xf32>
    %123 = math.tanh %122 : vector<8x32xf32>
    %124 = arith.mulf %120, %102 : vector<8x32xf32>
    %125 = arith.mulf %119, %123 : vector<8x32xf32>
    %126 = arith.addf %124, %125 : vector<8x32xf32>
    %127 = math.tanh %126 : vector<8x32xf32>
    %128 = arith.mulf %121, %127 : vector<8x32xf32>
    %129 = arith.index_cast %108 : i32 to index
    %c0_35 = arith.constant 0 : index
    %130 = vector.load %arg9[%129, %c0_35] : memref<64x32xf32, #tpu.memory_space<vmem>>, vector<8x32xf32>
    tpu.vector_store %arg9[%129, %c0_35], %128 {strides = array<i32>} : memref<64x32xf32, #tpu.memory_space<vmem>>, vector<8x32xf32>,
    %c5_i32 = arith.constant 5 : i32
    %c8_i32_36 = arith.constant 8 : i32
    %131 = arith.muli %c5_i32, %c8_i32_36 : i32
    %132 = tpu.assume_multiple %131, 8 : i32
    %133 = arith.index_cast %132 : i32 to index
    %c0_37 = arith.constant 0 : index
    %134 = vector.load %arg8[%133, %c0_37] : memref<64x128xf32, #tpu.memory_space<vmem>>, vector<8x128xf32>
    %cst_38 = arith.constant dense<0.000000e+00> : vector<8x128xf32>
    %135 = tpu.matmul %128, %8, %cst_38 {dimension_numbers = #tpu.dot_dimension_numbers<[1], [0], [0], [1], [0, 0, 1, 1], [], []>} : vector<8x32xf32>, vector<32x128xf32>, vector<8x128xf32> -> vector<8x128xf32>
    %136 = arith.addf %134, %135 : vector<8x128xf32>
    %137 = vector.extract_strided_slice %136 {offsets = [0, 0], sizes = [8, 96], strides = [1, 1]} : vector<8x128xf32> to vector<8x96xf32>
    %138 = arith.negf %137 : vector<8x96xf32>
    %139 = math.exp %138 : vector<8x96xf32>
    %cst_39 = arith.constant 1.000000e+00 : f32
    %140 = vector.broadcast %cst_39 : f32 to vector<8x96xf32>
    %141 = arith.addf %140, %139 : vector<8x96xf32>
    %142 = arith.divf %140, %141 : vector<8x96xf32>
    %143 = vector.extract_strided_slice %142 {offsets = [0, 0], sizes = [8, 32], strides = [1, 1]} : vector<8x96xf32> to vector<8x32xf32>
    %144 = vector.extract_strided_slice %142 {offsets = [0, 32], sizes = [8, 32], strides = [1, 1]} : vector<8x96xf32> to vector<8x32xf32>
    %145 = vector.extract_strided_slice %142 {offsets = [0, 64], sizes = [8, 32], strides = [1, 1]} : vector<8x96xf32> to vector<8x32xf32>
    %146 = vector.extract_strided_slice %136 {offsets = [0, 96], sizes = [8, 32], strides = [1, 1]} : vector<8x128xf32> to vector<8x32xf32>
    %147 = math.tanh %146 : vector<8x32xf32>
    %148 = arith.mulf %144, %126 : vector<8x32xf32>
    %149 = arith.mulf %143, %147 : vector<8x32xf32>
    %150 = arith.addf %148, %149 : vector<8x32xf32>
    %151 = math.tanh %150 : vector<8x32xf32>
    %152 = arith.mulf %145, %151 : vector<8x32xf32>
    %153 = arith.index_cast %132 : i32 to index
    %c0_40 = arith.constant 0 : index
    %154 = vector.load %arg9[%153, %c0_40] : memref<64x32xf32, #tpu.memory_space<vmem>>, vector<8x32xf32>
    tpu.vector_store %arg9[%153, %c0_40], %152 {strides = array<i32>} : memref<64x32xf32, #tpu.memory_space<vmem>>, vector<8x32xf32>,
    %c6_i32 = arith.constant 6 : i32
    %c8_i32_41 = arith.constant 8 : i32
    %155 = arith.muli %c6_i32, %c8_i32_41 : i32
    %156 = tpu.assume_multiple %155, 8 : i32
    %157 = arith.index_cast %156 : i32 to index
    %c0_42 = arith.constant 0 : index
    %158 = vector.load %arg8[%157, %c0_42] : memref<64x128xf32, #tpu.memory_space<vmem>>, vector<8x128xf32>
    %cst_43 = arith.constant dense<0.000000e+00> : vector<8x128xf32>
    %159 = tpu.matmul %152, %8, %cst_43 {dimension_numbers = #tpu.dot_dimension_numbers<[1], [0], [0], [1], [0, 0, 1, 1], [], []>} : vector<8x32xf32>, vector<32x128xf32>, vector<8x128xf32> -> vector<8x128xf32>
    %160 = arith.addf %158, %159 : vector<8x128xf32>
    %161 = vector.extract_strided_slice %160 {offsets = [0, 0], sizes = [8, 96], strides = [1, 1]} : vector<8x128xf32> to vector<8x96xf32>
    %162 = arith.negf %161 : vector<8x96xf32>
    %163 = math.exp %162 : vector<8x96xf32>
    %cst_44 = arith.constant 1.000000e+00 : f32
    %164 = vector.broadcast %cst_44 : f32 to vector<8x96xf32>
    %165 = arith.addf %164, %163 : vector<8x96xf32>
    %166 = arith.divf %164, %165 : vector<8x96xf32>
    %167 = vector.extract_strided_slice %166 {offsets = [0, 0], sizes = [8, 32], strides = [1, 1]} : vector<8x96xf32> to vector<8x32xf32>
    %168 = vector.extract_strided_slice %166 {offsets = [0, 32], sizes = [8, 32], strides = [1, 1]} : vector<8x96xf32> to vector<8x32xf32>
    %169 = vector.extract_strided_slice %166 {offsets = [0, 64], sizes = [8, 32], strides = [1, 1]} : vector<8x96xf32> to vector<8x32xf32>
    %170 = vector.extract_strided_slice %160 {offsets = [0, 96], sizes = [8, 32], strides = [1, 1]} : vector<8x128xf32> to vector<8x32xf32>
    %171 = math.tanh %170 : vector<8x32xf32>
    %172 = arith.mulf %168, %150 : vector<8x32xf32>
    %173 = arith.mulf %167, %171 : vector<8x32xf32>
    %174 = arith.addf %172, %173 : vector<8x32xf32>
    %175 = math.tanh %174 : vector<8x32xf32>
    %176 = arith.mulf %169, %175 : vector<8x32xf32>
    %177 = arith.index_cast %156 : i32 to index
    %c0_45 = arith.constant 0 : index
    %178 = vector.load %arg9[%177, %c0_45] : memref<64x32xf32, #tpu.memory_space<vmem>>, vector<8x32xf32>
    tpu.vector_store %arg9[%177, %c0_45], %176 {strides = array<i32>} : memref<64x32xf32, #tpu.memory_space<vmem>>, vector<8x32xf32>,
    %c7_i32 = arith.constant 7 : i32
    %c8_i32_46 = arith.constant 8 : i32
    %179 = arith.muli %c7_i32, %c8_i32_46 : i32
    %180 = tpu.assume_multiple %179, 8 : i32
    %181 = arith.index_cast %180 : i32 to index
    %c0_47 = arith.constant 0 : index
    %182 = vector.load %arg8[%181, %c0_47] : memref<64x128xf32, #tpu.memory_space<vmem>>, vector<8x128xf32>
    %cst_48 = arith.constant dense<0.000000e+00> : vector<8x128xf32>
    %183 = tpu.matmul %176, %8, %cst_48 {dimension_numbers = #tpu.dot_dimension_numbers<[1], [0], [0], [1], [0, 0, 1, 1], [], []>} : vector<8x32xf32>, vector<32x128xf32>, vector<8x128xf32> -> vector<8x128xf32>
    %184 = arith.addf %182, %183 : vector<8x128xf32>
    %185 = vector.extract_strided_slice %184 {offsets = [0, 0], sizes = [8, 96], strides = [1, 1]} : vector<8x128xf32> to vector<8x96xf32>
    %186 = arith.negf %185 : vector<8x96xf32>
    %187 = math.exp %186 : vector<8x96xf32>
    %cst_49 = arith.constant 1.000000e+00 : f32
    %188 = vector.broadcast %cst_49 : f32 to vector<8x96xf32>
    %189 = arith.addf %188, %187 : vector<8x96xf32>
    %190 = arith.divf %188, %189 : vector<8x96xf32>
    %191 = vector.extract_strided_slice %190 {offsets = [0, 0], sizes = [8, 32], strides = [1, 1]} : vector<8x96xf32> to vector<8x32xf32>
    %192 = vector.extract_strided_slice %190 {offsets = [0, 32], sizes = [8, 32], strides = [1, 1]} : vector<8x96xf32> to vector<8x32xf32>
    %193 = vector.extract_strided_slice %190 {offsets = [0, 64], sizes = [8, 32], strides = [1, 1]} : vector<8x96xf32> to vector<8x32xf32>
    %194 = vector.extract_strided_slice %184 {offsets = [0, 96], sizes = [8, 32], strides = [1, 1]} : vector<8x128xf32> to vector<8x32xf32>
    %195 = math.tanh %194 : vector<8x32xf32>
    %196 = arith.mulf %192, %174 : vector<8x32xf32>
    %197 = arith.mulf %191, %195 : vector<8x32xf32>
    %198 = arith.addf %196, %197 : vector<8x32xf32>
    %199 = math.tanh %198 : vector<8x32xf32>
    %200 = arith.mulf %193, %199 : vector<8x32xf32>
    %201 = arith.index_cast %180 : i32 to index
    %c0_50 = arith.constant 0 : index
    %202 = vector.load %arg9[%201, %c0_50] : memref<64x32xf32, #tpu.memory_space<vmem>>, vector<8x32xf32>
    tpu.vector_store %arg9[%201, %c0_50], %200 {strides = array<i32>} : memref<64x32xf32, #tpu.memory_space<vmem>>, vector<8x32xf32>,
    %c8_i32_51 = arith.constant 8 : i32
    %c0_52 = arith.constant 0 : index
    %c0_53 = arith.constant 0 : index
    %203 = vector.load %arg9[%c0_52, %c0_53] : memref<64x32xf32, #tpu.memory_space<vmem>>, vector<64x32xf32>
    %c0_54 = arith.constant 0 : index
    %c0_55 = arith.constant 0 : index
    %204 = vector.load %arg5[%c0_54, %c0_55] : memref<32x128xf32, #tpu.memory_space<vmem>>, vector<32x128xf32>
    %cst_56 = arith.constant dense<0.000000e+00> : vector<64x128xf32>
    %205 = tpu.matmul %203, %204, %cst_56 {dimension_numbers = #tpu.dot_dimension_numbers<[1], [0], [0], [1], [0, 0, 1, 1], [], []>} : vector<64x32xf32>, vector<32x128xf32>, vector<64x128xf32> -> vector<64x128xf32>
    %c0_57 = arith.constant 0 : index
    %c0_58 = arith.constant 0 : index
    %206 = vector.load %arg6[%c0_57, %c0_58] : memref<1x128xf32, #tpu.memory_space<vmem>>, vector<1x128xf32>
    %207 = vector.broadcast %206 : vector<1x128xf32> to vector<64x128xf32>
    %208 = arith.addf %205, %207 : vector<64x128xf32>
    %cst_59 = arith.constant dense<0xFF800000> : vector<64xf32>
    %209 = vector.multi_reduction <maximumf>, %208, %cst_59 [1] : vector<64x128xf32> to vector<64xf32>
    %210 = vector.shape_cast %209 : vector<64xf32> to vector<64x1xf32>
    %211 = vector.broadcast %210 : vector<64x1xf32> to vector<64x128xf32>
    %212 = arith.subf %208, %211 : vector<64x128xf32>
    %213 = math.exp %212 : vector<64x128xf32>
    %cst_60 = arith.constant dense<0.000000e+00> : vector<64xf32>
    %214 = vector.multi_reduction <add>, %213, %cst_60 [1] : vector<64x128xf32> to vector<64xf32>
    %215 = vector.shape_cast %214 : vector<64xf32> to vector<64x1xf32>
    %216 = math.log %215 : vector<64x1xf32>
    %217 = vector.broadcast %216 : vector<64x1xf32> to vector<64x128xf32>
    %218 = arith.subf %212, %217 : vector<64x128xf32>
    %c0_61 = arith.constant 0 : index
    %c0_62 = arith.constant 0 : index
    %c0_63 = arith.constant 0 : index
    %219 = vector.load %arg7[%c0_61, %c0_62, %c0_63] : memref<1x64x128xf32, #tpu.memory_space<vmem>>, vector<1x64x128xf32>
    %220 = vector.shape_cast %219 : vector<1x64x128xf32> to vector<64x128xf32>
    %221 = vector.shape_cast %218 : vector<64x128xf32> to vector<1x64x128xf32>
    tpu.vector_store %arg7[%c0_61, %c0_62, %c0_63], %221 {strides = array<i32>} : memref<1x64x128xf32, #tpu.memory_space<vmem>>, vector<1x64x128xf32>,
    return
  }
  func.func @transform_0(%arg0: i32) -> (i32, i32, i32) {
    %c0_i32 = arith.constant 0 : i32
    %c0_i32_0 = arith.constant 0 : i32
    %c0_i32_1 = arith.constant 0 : i32
    return %arg0, %c0_i32, %c0_i32_0 : i32, i32, i32
  }
  func.func @transform_1(%arg0: i32) -> (i32, i32) {
    %c0_i32 = arith.constant 0 : i32
    %c0_i32_0 = arith.constant 0 : i32
    %c0_i32_1 = arith.constant 0 : i32
    return %c0_i32, %c0_i32_0 : i32, i32
  }
  func.func @transform_2(%arg0: i32) -> (i32, i32) {
    %c0_i32 = arith.constant 0 : i32
    %c0_i32_0 = arith.constant 0 : i32
    %c0_i32_1 = arith.constant 0 : i32
    return %c0_i32, %c0_i32_0 : i32, i32
  }
  func.func @transform_3(%arg0: i32) -> (i32, i32) {
    %c0_i32 = arith.constant 0 : i32
    %c0_i32_0 = arith.constant 0 : i32
    %c0_i32_1 = arith.constant 0 : i32
    return %c0_i32, %c0_i32_0 : i32, i32
  }
  func.func @transform_4(%arg0: i32) -> (i32, i32) {
    %c0_i32 = arith.constant 0 : i32
    %c0_i32_0 = arith.constant 0 : i32
    %c0_i32_1 = arith.constant 0 : i32
    return %c0_i32, %c0_i32_0 : i32, i32
  }
  func.func @transform_5(%arg0: i32) -> (i32, i32) {
    %c0_i32 = arith.constant 0 : i32
    %c0_i32_0 = arith.constant 0 : i32
    %c0_i32_1 = arith.constant 0 : i32
    return %c0_i32, %c0_i32_0 : i32, i32
  }
  func.func @transform_6(%arg0: i32) -> (i32, i32, i32) {
    %c0_i32 = arith.constant 0 : i32
    %c0_i32_0 = arith.constant 0 : i32
    %c0_i32_1 = arith.constant 0 : i32
    return %arg0, %c0_i32, %c0_i32_0 : i32, i32, i32
  }
}

</mosaic_0001>

<llo_original>
// kernel: tpu_custom_call.1
$region0: #{tpu_custom_call.1}
  #allocation0 [shape = 'u32[]', space=smem, size = 0x4, offset = 0x4, fixed_abs, tag = 'smem constant byte address 0x4 - core index']
  #allocation1 [shape = 'u32[144,128]{1,0:T(1,128)}', space=vmem, size = 0x12000, scoped, tag = 'internal scratch']
  #allocation2 [shape = 'f32[64,128]{1,0:T(8,128)}', space=vmem, size = 0x8000, scoped, tag = 'scratch operand']
  #allocation3 [shape = 'f32[64,32]{1,0:T(8,128)}', space=vmem, size = 0x8000, scoped, tag = 'scratch operand']
  %s0 = inlined_call_operand.vmem [shape: f32[1,64,32], index: 0, kind: input, shape index: {}]
  %s1 = inlined_call_operand.vmem [shape: f32[32,128], index: 1, kind: input, shape index: {}]
  %s2 = inlined_call_operand.vmem [shape: f32[32,128], index: 2, kind: input, shape index: {}]
  %s3 = inlined_call_operand.vmem [shape: f32[1,128], index: 3, kind: input, shape index: {}]
  %s4 = inlined_call_operand.vmem [shape: f32[32,128], index: 4, kind: input, shape index: {}]
  %s5 = inlined_call_operand.vmem [shape: f32[1,128], index: 5, kind: input, shape index: {}]
  %s6 = inlined_call_operand.hbm [shape: f32[1,64,128], index: 6, kind: output, shape index: {}]
  %s7 = sld [smem:[#allocation0]]
  $region34: #{tpu_custom_call.1} parent=0
    _
  %s9 = ssub.s32 1, %s7
  %s10 = scalar_select 0, %s9, %s7
  $region1: #{tpu_custom_call.1} parent=0
    #allocation4 [shape = 'u8[32768]{0}', space=vmem, size = 0x8000, scoped, tag = 'output window, operand 0, single buffered']
    #allocation5 [shape = 's32[1]{0}', space=sflag, size = 0x4, scoped, tag = 'scoped memory for tpu_custom_call.1']
    %11 = vsyncpa [#allocation5], 0
    // Predicated region
    $region2: #{tpu_custom_call.1} parent=1 // pred_check
      _
    $region3: #{tpu_custom_call.1} parent=1 // pred_check_branch
      %13 = sbr.rel (0) target = $region5
    $region4: #{tpu_custom_call.1} parent=1 // pred_region
      _
    $region5: #{tpu_custom_call.1} parent=1 // pred_fallthru
      _
    // Predicated region
    $region6: #{tpu_custom_call.1} parent=1 // pred_check
      _
    $region7: #{tpu_custom_call.1} parent=1 // pred_check_branch
      %15 = sbr.rel (0) target = $region9
    $region8: #{tpu_custom_call.1} parent=1 // pred_region
      _
    $region9: #{tpu_custom_call.1} parent=1 // pred_fallthru
      _
    // Predicated region
    $region10: #{tpu_custom_call.1} parent=1 // pred_check
      _
    $region11: #{tpu_custom_call.1} parent=1 // pred_check_branch
      %17 = sbr.rel (0) target = $region13
    $region12: #{tpu_custom_call.1} parent=1 // pred_region
      _
    $region13: #{tpu_custom_call.1} parent=1 // pred_fallthru
      _
    // Predicated region
    $region14: #{tpu_custom_call.1} parent=1 // pred_check
      _
    $region15: #{tpu_custom_call.1} parent=1 // pred_check_branch
      %19 = sbr.rel (0) target = $region17
    $region16: #{tpu_custom_call.1} parent=1 // pred_region
      _
    $region17: #{tpu_custom_call.1} parent=1 // pred_fallthru
      _
    // Predicated region
    $region18: #{tpu_custom_call.1} parent=1 // pred_check
      _
    $region19: #{tpu_custom_call.1} parent=1 // pred_check_branch
      %21 = sbr.rel (0) target = $region21
    $region20: #{tpu_custom_call.1} parent=1 // pred_region
      _
    $region21: #{tpu_custom_call.1} parent=1 // pred_fallthru
      _
    // Predicated region
    $region22: #{tpu_custom_call.1} parent=1 // pred_check
      _
    $region23: #{tpu_custom_call.1} parent=1 // pred_check_branch
      %23 = sbr.rel (0) target = $region25
    $region24: #{tpu_custom_call.1} parent=1 // pred_region
      _
    $region25: #{tpu_custom_call.1} parent=1 // pred_fallthru
      _
    %v24 = vld [vmem:[%s0] sm:$0xff]
    %v25 = vld [vmem:[%s0 + $0x8] sm:$0xff]
    %v26 = vld [vmem:[%s0 + $0x10] sm:$0xff]
    %v27 = vld [vmem:[%s0 + $0x18] sm:$0xff]
    %v28 = vld [vmem:[%s0 + $0x20] sm:$0xff]
    %v29 = vld [vmem:[%s0 + $0x28] sm:$0xff]
    %v30 = vld [vmem:[%s0 + $0x30] sm:$0xff]
    %v31 = vld [vmem:[%s0 + $0x38] sm:$0xff]
    %v32 = vld [vmem:[%s1] sm:$0xff]
    %v33 = vld [vmem:[%s1 + $0x8] sm:$0xff]
    %v34 = vld [vmem:[%s1 + $0x10] sm:$0xff]
    %v35 = vld [vmem:[%s1 + $0x18] sm:$0xff]
    %v36 = vld [vmem:[%s3] sm:$0x1]
    %v38 = vlaneseq
    %v39 = vshrl.u32 %v38, 7
    %v40 = vsub.s32 0, %v39
    %v41 = vrot.slane %v36, %v40
    %vm43 = vcmask 261120
    %v45 = vsel %vm43, %v24, 0
    %v48 = vsel %vm43, %v25, 0
    %v51 = vsel %vm43, %v26, 0
    %v54 = vsel %vm43, %v27, 0
    %v57 = vsel %vm43, %v28, 0
    %v60 = vsel %vm43, %v29, 0
    %v63 = vsel %vm43, %v30, 0
    %v66 = vsel %vm43, %v31, 0
    %68 = vmatprep.subr.mxu0 0.0
    %69 = vmatpush1.msra.mxu0 0.0
    %70 = vmatprep.subr.mxu0 0.0
    %71 = vmatpush1.msra.mxu0 0.0
    %72 = vmatprep.subr.mxu0 0.0
    %73 = vmatpush1.msra.mxu0 0.0
    %74 = vmatprep.subr.mxu0 0.0
    %75 = vmatpush1.msra.mxu0 0.0
    %76 = vmatprep.subr.mxu0 0.0
    %77 = vmatpush1.msra.mxu0 0.0
    %78 = vmatprep.subr.mxu0 0.0
    %79 = vmatpush1.msra.mxu0 0.0
    %80 = vmatprep.subr.mxu0 0.0
    %81 = vmatpush1.msra.mxu0 0.0
    %82 = vmatprep.subr.mxu0 0.0
    %83 = vmatpush1.msra.mxu0 0.0
    %84 = vmatprep.subr.mxu0 0.0
    %85 = vmatpush1.msra.mxu0 0.0
    %86 = vmatprep.subr.mxu0 0.0
    %87 = vmatpush1.msra.mxu0 0.0
    %88 = vmatprep.subr.mxu0 0.0
    %89 = vmatpush1.msra.mxu0 0.0
    %90 = vmatprep.subr.mxu0 0.0
    %91 = vmatpush1.msra.mxu0 0.0
    %92 = vmatprep.subr.mxu0 0.0
    %93 = vmatpush1.msra.mxu0 %v35
    %94 = vmatprep.subr.mxu0 0.0
    %95 = vmatpush1.msra.mxu0 %v34
    %96 = vmatprep.subr.mxu0 0.0
    %97 = vmatpush1.msra.mxu0 %v33
    %98 = vmatprep.subr.mxu0 0.0
    %99 = vmatpush1.msra.mxu0 %v32
    %100 = vmatprep.subr.mxu0 0.0
    %101 = vmatpush2.msra.mxu0 0.0
    %102 = vmatprep.subr.mxu0 0.0
    %103 = vmatpush2.msra.mxu0 0.0
    %104 = vmatprep.subr.mxu0 0.0
    %105 = vmatpush2.msra.mxu0 0.0
    %106 = vmatprep.subr.mxu0 0.0
    %107 = vmatpush2.msra.mxu0 0.0
    %108 = vmatprep.subr.mxu0 0.0
    %109 = vmatpush2.msra.mxu0 0.0
    %110 = vmatprep.subr.mxu0 0.0
    %111 = vmatpush2.msra.mxu0 0.0
    %112 = vmatprep.subr.mxu0 0.0
    %113 = vmatpush2.msra.mxu0 0.0
    %114 = vmatprep.subr.mxu0 0.0
    %115 = vmatpush2.msra.mxu0 0.0
    %116 = vmatprep.subr.mxu0 0.0
    %117 = vmatpush2.msra.mxu0 0.0
    %118 = vmatprep.subr.mxu0 0.0
    %119 = vmatpush2.msra.mxu0 0.0
    %120 = vmatprep.subr.mxu0 0.0
    %121 = vmatpush2.msra.mxu0 0.0
    %122 = vmatprep.subr.mxu0 0.0
    %123 = vmatpush2.msra.mxu0 0.0
    %124 = vmatprep.subr.mxu0 0.0
    %125 = vmatpush2.msra.mxu0 0.0
    %126 = vmatprep.subr.mxu0 0.0
    %127 = vmatpush2.msra.mxu0 0.0
    %128 = vmatprep.subr.mxu0 0.0
    %129 = vmatpush2.msra.mxu0 0.0
    %130 = vmatprep.subr.mxu0 0.0
    %131 = vmatpush2.msra.mxu0 0.0
    %132 = vmatprep.mubr.f32.mxu0 0.0
    %133 = vmatmul.mubr.f32.gmra.mxu0 %v45
    %v134 = vpop.f32.mrf.mxu0
    %v135 = vadd.f32 %v41, %v134
    %v136 = vpop.f32.mrf.mxu0
    %137 = vmatprep.mubr.f32.mxu0 0.0
    %138 = vmatmul.mubr.f32.gmra.mxu0 %v48
    %v139 = vpop.f32.mrf.mxu0
    %v140 = vadd.f32 %v41, %v139
    %v141 = vpop.f32.mrf.mxu0
    %142 = vmatprep.mubr.f32.mxu0 0.0
    %143 = vmatmul.mubr.f32.gmra.mxu0 %v51
    %v144 = vpop.f32.mrf.mxu0
    %v145 = vadd.f32 %v41, %v144
    %v146 = vpop.f32.mrf.mxu0
    %147 = vmatprep.mubr.f32.mxu0 0.0
    %148 = vmatmul.mubr.f32.gmra.mxu0 %v54
    %v149 = vpop.f32.mrf.mxu0
    %v150 = vadd.f32 %v41, %v149
    %v151 = vpop.f32.mrf.mxu0
    %152 = vmatprep.mubr.f32.mxu0 0.0
    %153 = vmatmul.mubr.f32.gmra.mxu0 %v57
    %v154 = vpop.f32.mrf.mxu0
    %v155 = vadd.f32 %v41, %v154
    %v156 = vpop.f32.mrf.mxu0
    %157 = vmatprep.mubr.f32.mxu0 0.0
    %158 = vmatmul.mubr.f32.gmra.mxu0 %v60
    %v159 = vpop.f32.mrf.mxu0
    %v160 = vadd.f32 %v41, %v159
    %v161 = vpop.f32.mrf.mxu0
    %162 = vmatprep.mubr.f32.mxu0 0.0
    %163 = vmatmul.mubr.f32.gmra.mxu0 %v63
    %v164 = vpop.f32.mrf.mxu0
    %v165 = vadd.f32 %v41, %v164
    %v166 = vpop.f32.mrf.mxu0
    %167 = vmatprep.mubr.f32.mxu0 0.0
    %168 = vmatmul.mubr.f32.gmra.mxu0 %v66
    %v169 = vpop.f32.mrf.mxu0
    %v170 = vadd.f32 %v41, %v169
    %v171 = vpop.f32.mrf.mxu0
    %172 = vdwg.mxu0
    %173 = vst [vmem:[#allocation2] sm:$0xff] %v135
    %174 = vst [vmem:[#allocation2 + $0x8] sm:$0xff] %v140
    %175 = vst [vmem:[#allocation2 + $0x10] sm:$0xff] %v145
    %176 = vst [vmem:[#allocation2 + $0x18] sm:$0xff] %v150
    %177 = vst [vmem:[#allocation2 + $0x20] sm:$0xff] %v155
    %178 = vst [vmem:[#allocation2 + $0x28] sm:$0xff] %v160
    %179 = vst [vmem:[#allocation2 + $0x30] sm:$0xff] %v165
    %180 = vst [vmem:[#allocation2 + $0x38] sm:$0xff] %v170
    %v181 = vld [vmem:[%s2] sm:$0xff]
    %v182 = vld [vmem:[%s2 + $0x8] sm:$0xff]
    %v183 = vld [vmem:[%s2 + $0x10] sm:$0xff]
    %v184 = vld [vmem:[%s2 + $0x18] sm:$0xff]
    %v185 = vld [vmem:[#allocation2] sm:$0xff]
    %v187 = vsel %vm43, 0.0, 0
    %189 = vmatprep.subr.mxu0 0.0
    %190 = vmatpush1.msra.mxu0 0.0
    %191 = vmatprep.subr.mxu0 0.0
    %192 = vmatpush1.msra.mxu0 0.0
    %193 = vmatprep.subr.mxu0 0.0
    %194 = vmatpush1.msra.mxu0 0.0
    %195 = vmatprep.subr.mxu0 0.0
    %196 = vmatpush1.msra.mxu0 0.0
    %197 = vmatprep.subr.mxu0 0.0
    %198 = vmatpush1.msra.mxu0 0.0
    %199 = vmatprep.subr.mxu0 0.0
    %200 = vmatpush1.msra.mxu0 0.0
    %201 = vmatprep.subr.mxu0 0.0
    %202 = vmatpush1.msra.mxu0 0.0
    %203 = vmatprep.subr.mxu0 0.0
    %204 = vmatpush1.msra.mxu0 0.0
    %205 = vmatprep.subr.mxu0 0.0
    %206 = vmatpush1.msra.mxu0 0.0
    %207 = vmatprep.subr.mxu0 0.0
    %208 = vmatpush1.msra.mxu0 0.0
    %209 = vmatprep.subr.mxu0 0.0
    %210 = vmatpush1.msra.mxu0 0.0
    %211 = vmatprep.subr.mxu0 0.0
    %212 = vmatpush1.msra.mxu0 0.0
    %213 = vmatprep.subr.mxu0 0.0
    %214 = vmatpush1.msra.mxu0 %v184
    %215 = vmatprep.subr.mxu0 0.0
    %216 = vmatpush1.msra.mxu0 %v183
    %217 = vmatprep.subr.mxu0 0.0
    %218 = vmatpush1.msra.mxu0 %v182
    %219 = vmatprep.subr.mxu0 0.0
    %220 = vmatpush1.msra.mxu0 %v181
    %221 = vmatprep.subr.mxu0 0.0
    %222 = vmatpush2.msra.mxu0 0.0
    %223 = vmatprep.subr.mxu0 0.0
    %224 = vmatpush2.msra.mxu0 0.0
    %225 = vmatprep.subr.mxu0 0.0
    %226 = vmatpush2.msra.mxu0 0.0
    %227 = vmatprep.subr.mxu0 0.0
    %228 = vmatpush2.msra.mxu0 0.0
    %229 = vmatprep.subr.mxu0 0.0
    %230 = vmatpush2.msra.mxu0 0.0
    %231 = vmatprep.subr.mxu0 0.0
    %232 = vmatpush2.msra.mxu0 0.0
    %233 = vmatprep.subr.mxu0 0.0
    %234 = vmatpush2.msra.mxu0 0.0
    %235 = vmatprep.subr.mxu0 0.0
    %236 = vmatpush2.msra.mxu0 0.0
    %237 = vmatprep.subr.mxu0 0.0
    %238 = vmatpush2.msra.mxu0 0.0
    %239 = vmatprep.subr.mxu0 0.0
    %240 = vmatpush2.msra.mxu0 0.0
    %241 = vmatprep.subr.mxu0 0.0
    %242 = vmatpush2.msra.mxu0 0.0
    %243 = vmatprep.subr.mxu0 0.0
    %244 = vmatpush2.msra.mxu0 0.0
    %245 = vmatprep.subr.mxu0 0.0
    %246 = vmatpush2.msra.mxu0 0.0
    %247 = vmatprep.subr.mxu0 0.0
    %248 = vmatpush2.msra.mxu0 0.0
    %249 = vmatprep.subr.mxu0 0.0
    %250 = vmatpush2.msra.mxu0 0.0
    %251 = vmatprep.subr.mxu0 0.0
    %252 = vmatpush2.msra.mxu0 0.0
    %253 = vmatprep.mubr.f32.mxu0 0.0
    %254 = vmatmul.mubr.f32.gmra.mxu0 %v187
    %v255 = vpop.f32.mrf.mxu0
    %v256 = vadd.f32 0.0, %v255
    %v257 = vpop.f32.mrf.mxu0
    %258 = vdwg.mxu0
    %v259 = vadd.f32 %v185, %v256
    %v260 = vxor.u32 %v259, 2147483648
    %v261 = vmul.f32 %v260, 1.442695
    %v262 = vpow.pop %v261
    %v263 = vadd.f32 %v262, 1.0
    %v264 = vrcp.pop %v263
    %v265 = vmul.f32 1.0, %v264
    %v266 = vtanh.pop %v259
    %v267 = vmul.f32 %v265, 0.0
    %269 = vrot.lane.b32.xlu0 %v266, 32
    %v270 = vpop.permute.xlu0 %269
    %v272 = vmul.f32 %v265, %v270
    %274 = vrot.lane.b32.xlu0 %v272, 32
    %v275 = vpop.permute.xlu0 %274
    %v277 = vadd.f32 %v267, %v275
    %v278 = vtanh.pop %v277
    %280 = vrot.lane.b32.xlu0 %v278, 32
    %v281 = vpop.permute.xlu0 %280
    %v283 = vmul.f32 %v265, %v281
    %285 = vrot.lane.b32.xlu0 %v283, 64
    %v286 = vpop.permute.xlu0 %285
    %288 = vst.msk [vmem:[#allocation3] sm:$0xff] %vm43, %v286
    %s289 = scalar_lea.vmem [#allocation2], 8
    %v290 = vld [vmem:[%s289] sm:$0xff]
    %v291 = vsel %vm43, %v286, 0
    %293 = vmatprep.subr.mxu0 0.0
    %294 = vmatpush1.msra.mxu0 0.0
    %295 = vmatprep.subr.mxu0 0.0
    %296 = vmatpush1.msra.mxu0 0.0
    %297 = vmatprep.subr.mxu0 0.0
    %298 = vmatpush1.msra.mxu0 0.0
    %299 = vmatprep.subr.mxu0 0.0
    %300 = vmatpush1.msra.mxu0 0.0
    %301 = vmatprep.subr.mxu0 0.0
    %302 = vmatpush1.msra.mxu0 0.0
    %303 = vmatprep.subr.mxu0 0.0
    %304 = vmatpush1.msra.mxu0 0.0
    %305 = vmatprep.subr.mxu0 0.0
    %306 = vmatpush1.msra.mxu0 0.0
    %307 = vmatprep.subr.mxu0 0.0
    %308 = vmatpush1.msra.mxu0 0.0
    %309 = vmatprep.subr.mxu0 0.0
    %310 = vmatpush1.msra.mxu0 0.0
    %311 = vmatprep.subr.mxu0 0.0
    %312 = vmatpush1.msra.mxu0 0.0
    %313 = vmatprep.subr.mxu0 0.0
    %314 = vmatpush1.msra.mxu0 0.0
    %315 = vmatprep.subr.mxu0 0.0
    %316 = vmatpush1.msra.mxu0 0.0
    %317 = vmatprep.subr.mxu0 0.0
    %318 = vmatpush1.msra.mxu0 %v184
    %319 = vmatprep.subr.mxu0 0.0
    %320 = vmatpush1.msra.mxu0 %v183
    %321 = vmatprep.subr.mxu0 0.0
    %322 = vmatpush1.msra.mxu0 %v182
    %323 = vmatprep.subr.mxu0 0.0
    %324 = vmatpush1.msra.mxu0 %v181
    %325 = vmatprep.subr.mxu0 0.0
    %326 = vmatpush2.msra.mxu0 0.0
    %327 = vmatprep.subr.mxu0 0.0
    %328 = vmatpush2.msra.mxu0 0.0
    %329 = vmatprep.subr.mxu0 0.0
    %330 = vmatpush2.msra.mxu0 0.0
    %331 = vmatprep.subr.mxu0 0.0
    %332 = vmatpush2.msra.mxu0 0.0
    %333 = vmatprep.subr.mxu0 0.0
    %334 = vmatpush2.msra.mxu0 0.0
    %335 = vmatprep.subr.mxu0 0.0
    %336 = vmatpush2.msra.mxu0 0.0
    %337 = vmatprep.subr.mxu0 0.0
    %338 = vmatpush2.msra.mxu0 0.0
    %339 = vmatprep.subr.mxu0 0.0
    %340 = vmatpush2.msra.mxu0 0.0
    %341 = vmatprep.subr.mxu0 0.0
    %342 = vmatpush2.msra.mxu0 0.0
    %343 = vmatprep.subr.mxu0 0.0
    %344 = vmatpush2.msra.mxu0 0.0
    %345 = vmatprep.subr.mxu0 0.0
    %346 = vmatpush2.msra.mxu0 0.0
    %347 = vmatprep.subr.mxu0 0.0
    %348 = vmatpush2.msra.mxu0 0.0
    %349 = vmatprep.subr.mxu0 0.0
    %350 = vmatpush2.msra.mxu0 0.0
    %351 = vmatprep.subr.mxu0 0.0
    %352 = vmatpush2.msra.mxu0 0.0
    %353 = vmatprep.subr.mxu0 0.0
    %354 = vmatpush2.msra.mxu0 0.0
    %355 = vmatprep.subr.mxu0 0.0
    %356 = vmatpush2.msra.mxu0 0.0
    %357 = vmatprep.mubr.f32.mxu0 0.0
    %358 = vmatmul.mubr.f32.gmra.mxu0 %v291
    %v359 = vpop.f32.mrf.mxu0
    %v360 = vadd.f32 0.0, %v359
    %v361 = vpop.f32.mrf.mxu0
    %362 = vdwg.mxu0
    %v363 = vadd.f32 %v290, %v360
    %v364 = vxor.u32 %v363, 2147483648
    %v365 = vmul.f32 %v364, 1.442695
    %v366 = vpow.pop %v365
    %v367 = vadd.f32 %v366, 1.0
    %v368 = vrcp.pop %v367
    %v369 = vmul.f32 1.0, %v368
    %v370 = vtanh.pop %v363
    %v371 = vmul.f32 %v369, %v277
    %373 = vrot.lane.b32.xlu0 %v370, 32
    %v374 = vpop.permute.xlu0 %373
    %v376 = vmul.f32 %v369, %v374
    %378 = vrot.lane.b32.xlu0 %v376, 32
    %v379 = vpop.permute.xlu0 %378
    %v381 = vadd.f32 %v371, %v379
    %v382 = vtanh.pop %v381
    %384 = vrot.lane.b32.xlu0 %v382, 32
    %v385 = vpop.permute.xlu0 %384
    %v387 = vmul.f32 %v369, %v385
    %389 = vrot.lane.b32.xlu0 %v387, 64
    %v390 = vpop.permute.xlu0 %389
    %s392 = scalar_lea.vmem [#allocation3], 8
    %393 = vst.msk [vmem:[%s392] sm:$0xff] %vm43, %v390
    %s394 = scalar_lea.vmem [#allocation2], 16
    %v395 = vld [vmem:[%s394] sm:$0xff]
    %v396 = vsel %vm43, %v390, 0
    %398 = vmatprep.subr.mxu0 0.0
    %399 = vmatpush1.msra.mxu0 0.0
    %400 = vmatprep.subr.mxu0 0.0
    %401 = vmatpush1.msra.mxu0 0.0
    %402 = vmatprep.subr.mxu0 0.0
    %403 = vmatpush1.msra.mxu0 0.0
    %404 = vmatprep.subr.mxu0 0.0
    %405 = vmatpush1.msra.mxu0 0.0
    %406 = vmatprep.subr.mxu0 0.0
    %407 = vmatpush1.msra.mxu0 0.0
    %408 = vmatprep.subr.mxu0 0.0
    %409 = vmatpush1.msra.mxu0 0.0
    %410 = vmatprep.subr.mxu0 0.0
    %411 = vmatpush1.msra.mxu0 0.0
    %412 = vmatprep.subr.mxu0 0.0
    %413 = vmatpush1.msra.mxu0 0.0
    %414 = vmatprep.subr.mxu0 0.0
    %415 = vmatpush1.msra.mxu0 0.0
    %416 = vmatprep.subr.mxu0 0.0
    %417 = vmatpush1.msra.mxu0 0.0
    %418 = vmatprep.subr.mxu0 0.0
    %419 = vmatpush1.msra.mxu0 0.0
    %420 = vmatprep.subr.mxu0 0.0
    %421 = vmatpush1.msra.mxu0 0.0
    %422 = vmatprep.subr.mxu0 0.0
    %423 = vmatpush1.msra.mxu0 %v184
    %424 = vmatprep.subr.mxu0 0.0
    %425 = vmatpush1.msra.mxu0 %v183
    %426 = vmatprep.subr.mxu0 0.0
    %427 = vmatpush1.msra.mxu0 %v182
    %428 = vmatprep.subr.mxu0 0.0
    %429 = vmatpush1.msra.mxu0 %v181
    %430 = vmatprep.subr.mxu0 0.0
    %431 = vmatpush2.msra.mxu0 0.0
    %432 = vmatprep.subr.mxu0 0.0
    %433 = vmatpush2.msra.mxu0 0.0
    %434 = vmatprep.subr.mxu0 0.0
    %435 = vmatpush2.msra.mxu0 0.0
    %436 = vmatprep.subr.mxu0 0.0
    %437 = vmatpush2.msra.mxu0 0.0
    %438 = vmatprep.subr.mxu0 0.0
    %439 = vmatpush2.msra.mxu0 0.0
    %440 = vmatprep.subr.mxu0 0.0
    %441 = vmatpush2.msra.mxu0 0.0
    %442 = vmatprep.subr.mxu0 0.0
    %443 = vmatpush2.msra.mxu0 0.0
    %444 = vmatprep.subr.mxu0 0.0
    %445 = vmatpush2.msra.mxu0 0.0
    %446 = vmatprep.subr.mxu0 0.0
    %447 = vmatpush2.msra.mxu0 0.0
    %448 = vmatprep.subr.mxu0 0.0
    %449 = vmatpush2.msra.mxu0 0.0
    %450 = vmatprep.subr.mxu0 0.0
    %451 = vmatpush2.msra.mxu0 0.0
    %452 = vmatprep.subr.mxu0 0.0
    %453 = vmatpush2.msra.mxu0 0.0
    %454 = vmatprep.subr.mxu0 0.0
    %455 = vmatpush2.msra.mxu0 0.0
    %456 = vmatprep.subr.mxu0 0.0
    %457 = vmatpush2.msra.mxu0 0.0
    %458 = vmatprep.subr.mxu0 0.0
    %459 = vmatpush2.msra.mxu0 0.0
    %460 = vmatprep.subr.mxu0 0.0
    %461 = vmatpush2.msra.mxu0 0.0
    %462 = vmatprep.mubr.f32.mxu0 0.0
    %463 = vmatmul.mubr.f32.gmra.mxu0 %v396
    %v464 = vpop.f32.mrf.mxu0
    %v465 = vadd.f32 0.0, %v464
    %v466 = vpop.f32.mrf.mxu0
    %467 = vdwg.mxu0
    %v468 = vadd.f32 %v395, %v465
    %v469 = vxor.u32 %v468, 2147483648
    %v470 = vmul.f32 %v469, 1.442695
    %v471 = vpow.pop %v470
    %v472 = vadd.f32 %v471, 1.0
    %v473 = vrcp.pop %v472
    %v474 = vmul.f32 1.0, %v473
    %v475 = vtanh.pop %v468
    %v476 = vmul.f32 %v474, %v381
    %478 = vrot.lane.b32.xlu0 %v475, 32
    %v479 = vpop.permute.xlu0 %478
    %v481 = vmul.f32 %v474, %v479
    %483 = vrot.lane.b32.xlu0 %v481, 32
    %v484 = vpop.permute.xlu0 %483
    %v486 = vadd.f32 %v476, %v484
    %v487 = vtanh.pop %v486
    %489 = vrot.lane.b32.xlu0 %v487, 32
    %v490 = vpop.permute.xlu0 %489
    %v492 = vmul.f32 %v474, %v490
    %494 = vrot.lane.b32.xlu0 %v492, 64
    %v495 = vpop.permute.xlu0 %494
    %s497 = scalar_lea.vmem [#allocation3], 16
    %498 = vst.msk [vmem:[%s497] sm:$0xff] %vm43, %v495
    %s499 = scalar_lea.vmem [#allocation2], 24
    %v500 = vld [vmem:[%s499] sm:$0xff]
    %v501 = vsel %vm43, %v495, 0
    %503 = vmatprep.subr.mxu0 0.0
    %504 = vmatpush1.msra.mxu0 0.0
    %505 = vmatprep.subr.mxu0 0.0
    %506 = vmatpush1.msra.mxu0 0.0
    %507 = vmatprep.subr.mxu0 0.0
    %508 = vmatpush1.msra.mxu0 0.0
    %509 = vmatprep.subr.mxu0 0.0
    %510 = vmatpush1.msra.mxu0 0.0
    %511 = vmatprep.subr.mxu0 0.0
    %512 = vmatpush1.msra.mxu0 0.0
    %513 = vmatprep.subr.mxu0 0.0
    %514 = vmatpush1.msra.mxu0 0.0
    %515 = vmatprep.subr.mxu0 0.0
    %516 = vmatpush1.msra.mxu0 0.0
    %517 = vmatprep.subr.mxu0 0.0
    %518 = vmatpush1.msra.mxu0 0.0
    %519 = vmatprep.subr.mxu0 0.0
    %520 = vmatpush1.msra.mxu0 0.0
    %521 = vmatprep.subr.mxu0 0.0
    %522 = vmatpush1.msra.mxu0 0.0
    %523 = vmatprep.subr.mxu0 0.0
    %524 = vmatpush1.msra.mxu0 0.0
    %525 = vmatprep.subr.mxu0 0.0
    %526 = vmatpush1.msra.mxu0 0.0
    %527 = vmatprep.subr.mxu0 0.0
    %528 = vmatpush1.msra.mxu0 %v184
    %529 = vmatprep.subr.mxu0 0.0
    %530 = vmatpush1.msra.mxu0 %v183
    %531 = vmatprep.subr.mxu0 0.0
    %532 = vmatpush1.msra.mxu0 %v182
    %533 = vmatprep.subr.mxu0 0.0
    %534 = vmatpush1.msra.mxu0 %v181
    %535 = vmatprep.subr.mxu0 0.0
    %536 = vmatpush2.msra.mxu0 0.0
    %537 = vmatprep.subr.mxu0 0.0
    %538 = vmatpush2.msra.mxu0 0.0
    %539 = vmatprep.subr.mxu0 0.0
    %540 = vmatpush2.msra.mxu0 0.0
    %541 = vmatprep.subr.mxu0 0.0
    %542 = vmatpush2.msra.mxu0 0.0
    %543 = vmatprep.subr.mxu0 0.0
    %544 = vmatpush2.msra.mxu0 0.0
    %545 = vmatprep.subr.mxu0 0.0
    %546 = vmatpush2.msra.mxu0 0.0
    %547 = vmatprep.subr.mxu0 0.0
    %548 = vmatpush2.msra.mxu0 0.0
    %549 = vmatprep.subr.mxu0 0.0
    %550 = vmatpush2.msra.mxu0 0.0
    %551 = vmatprep.subr.mxu0 0.0
    %552 = vmatpush2.msra.mxu0 0.0
    %553 = vmatprep.subr.mxu0 0.0
    %554 = vmatpush2.msra.mxu0 0.0
    %555 = vmatprep.subr.mxu0 0.0
    %556 = vmatpush2.msra.mxu0 0.0
    %557 = vmatprep.subr.mxu0 0.0
    %558 = vmatpush2.msra.mxu0 0.0
    %559 = vmatprep.subr.mxu0 0.0
    %560 = vmatpush2.msra.mxu0 0.0
    %561 = vmatprep.subr.mxu0 0.0
    %562 = vmatpush2.msra.mxu0 0.0
    %563 = vmatprep.subr.mxu0 0.0
    %564 = vmatpush2.msra.mxu0 0.0
    %565 = vmatprep.subr.mxu0 0.0
    %566 = vmatpush2.msra.mxu0 0.0
    %567 = vmatprep.mubr.f32.mxu0 0.0
    %568 = vmatmul.mubr.f32.gmra.mxu0 %v501
    %v569 = vpop.f32.mrf.mxu0
    %v570 = vadd.f32 0.0, %v569
    %v571 = vpop.f32.mrf.mxu0
    %572 = vdwg.mxu0
    %v573 = vadd.f32 %v500, %v570
    %v574 = vxor.u32 %v573, 2147483648
    %v575 = vmul.f32 %v574, 1.442695
    %v576 = vpow.pop %v575
    %v577 = vadd.f32 %v576, 1.0
    %v578 = vrcp.pop %v577
    %v579 = vmul.f32 1.0, %v578
    %v580 = vtanh.pop %v573
    %v581 = vmul.f32 %v579, %v486
    %583 = vrot.lane.b32.xlu0 %v580, 32
    %v584 = vpop.permute.xlu0 %583
    %v586 = vmul.f32 %v579, %v584
    %588 = vrot.lane.b32.xlu0 %v586, 32
    %v589 = vpop.permute.xlu0 %588
    %v591 = vadd.f32 %v581, %v589
    %v592 = vtanh.pop %v591
    %594 = vrot.lane.b32.xlu0 %v592, 32
    %v595 = vpop.permute.xlu0 %594
    %v597 = vmul.f32 %v579, %v595
    %599 = vrot.lane.b32.xlu0 %v597, 64
    %v600 = vpop.permute.xlu0 %599
    %s602 = scalar_lea.vmem [#allocation3], 24
    %603 = vst.msk [vmem:[%s602] sm:$0xff] %vm43, %v600
    %s604 = scalar_lea.vmem [#allocation2], 32
    %v605 = vld [vmem:[%s604] sm:$0xff]
    %v606 = vsel %vm43, %v600, 0
    %608 = vmatprep.subr.mxu0 0.0
    %609 = vmatpush1.msra.mxu0 0.0
    %610 = vmatprep.subr.mxu0 0.0
    %611 = vmatpush1.msra.mxu0 0.0
    %612 = vmatprep.subr.mxu0 0.0
    %613 = vmatpush1.msra.mxu0 0.0
    %614 = vmatprep.subr.mxu0 0.0
    %615 = vmatpush1.msra.mxu0 0.0
    %616 = vmatprep.subr.mxu0 0.0
    %617 = vmatpush1.msra.mxu0 0.0
    %618 = vmatprep.subr.mxu0 0.0
    %619 = vmatpush1.msra.mxu0 0.0
    %620 = vmatprep.subr.mxu0 0.0
    %621 = vmatpush1.msra.mxu0 0.0
    %622 = vmatprep.subr.mxu0 0.0
    %623 = vmatpush1.msra.mxu0 0.0
    %624 = vmatprep.subr.mxu0 0.0
    %625 = vmatpush1.msra.mxu0 0.0
    %626 = vmatprep.subr.mxu0 0.0
    %627 = vmatpush1.msra.mxu0 0.0
    %628 = vmatprep.subr.mxu0 0.0
    %629 = vmatpush1.msra.mxu0 0.0
    %630 = vmatprep.subr.mxu0 0.0
    %631 = vmatpush1.msra.mxu0 0.0
    %632 = vmatprep.subr.mxu0 0.0
    %633 = vmatpush1.msra.mxu0 %v184
    %634 = vmatprep.subr.mxu0 0.0
    %635 = vmatpush1.msra.mxu0 %v183
    %636 = vmatprep.subr.mxu0 0.0
    %637 = vmatpush1.msra.mxu0 %v182
    %638 = vmatprep.subr.mxu0 0.0
    %639 = vmatpush1.msra.mxu0 %v181
    %640 = vmatprep.subr.mxu0 0.0
    %641 = vmatpush2.msra.mxu0 0.0
    %642 = vmatprep.subr.mxu0 0.0
    %643 = vmatpush2.msra.mxu0 0.0
    %644 = vmatprep.subr.mxu0 0.0
    %645 = vmatpush2.msra.mxu0 0.0
    %646 = vmatprep.subr.mxu0 0.0
    %647 = vmatpush2.msra.mxu0 0.0
    %648 = vmatprep.subr.mxu0 0.0
    %649 = vmatpush2.msra.mxu0 0.0
    %650 = vmatprep.subr.mxu0 0.0
    %651 = vmatpush2.msra.mxu0 0.0
    %652 = vmatprep.subr.mxu0 0.0
    %653 = vmatpush2.msra.mxu0 0.0
    %654 = vmatprep.subr.mxu0 0.0
    %655 = vmatpush2.msra.mxu0 0.0
    %656 = vmatprep.subr.mxu0 0.0
    %657 = vmatpush2.msra.mxu0 0.0
    %658 = vmatprep.subr.mxu0 0.0
    %659 = vmatpush2.msra.mxu0 0.0
    %660 = vmatprep.subr.mxu0 0.0
    %661 = vmatpush2.msra.mxu0 0.0
    %662 = vmatprep.subr.mxu0 0.0
    %663 = vmatpush2.msra.mxu0 0.0
    %664 = vmatprep.subr.mxu0 0.0
    %665 = vmatpush2.msra.mxu0 0.0
    %666 = vmatprep.subr.mxu0 0.0
    %667 = vmatpush2.msra.mxu0 0.0
    %668 = vmatprep.subr.mxu0 0.0
    %669 = vmatpush2.msra.mxu0 0.0
    %670 = vmatprep.subr.mxu0 0.0
    %671 = vmatpush2.msra.mxu0 0.0
    %672 = vmatprep.mubr.f32.mxu0 0.0
    %673 = vmatmul.mubr.f32.gmra.mxu0 %v606
    %v674 = vpop.f32.mrf.mxu0
    %v675 = vadd.f32 0.0, %v674
    %v676 = vpop.f32.mrf.mxu0
    %677 = vdwg.mxu0
    %v678 = vadd.f32 %v605, %v675
    %v679 = vxor.u32 %v678, 2147483648
    %v680 = vmul.f32 %v679, 1.442695
    %v681 = vpow.pop %v680
    %v682 = vadd.f32 %v681, 1.0
    %v683 = vrcp.pop %v682
    %v684 = vmul.f32 1.0, %v683
    %v685 = vtanh.pop %v678
    %v686 = vmul.f32 %v684, %v591
    %688 = vrot.lane.b32.xlu0 %v685, 32
    %v689 = vpop.permute.xlu0 %688
    %v691 = vmul.f32 %v684, %v689
    %693 = vrot.lane.b32.xlu0 %v691, 32
    %v694 = vpop.permute.xlu0 %693
    %v696 = vadd.f32 %v686, %v694
    %v697 = vtanh.pop %v696
    %699 = vrot.lane.b32.xlu0 %v697, 32
    %v700 = vpop.permute.xlu0 %699
    %v702 = vmul.f32 %v684, %v700
    %704 = vrot.lane.b32.xlu0 %v702, 64
    %v705 = vpop.permute.xlu0 %704
    %s707 = scalar_lea.vmem [#allocation3], 32
    %708 = vst.msk [vmem:[%s707] sm:$0xff] %vm43, %v705
    %s709 = scalar_lea.vmem [#allocation2], 40
    %v710 = vld [vmem:[%s709] sm:$0xff]
    %v711 = vsel %vm43, %v705, 0
    %713 = vmatprep.subr.mxu0 0.0
    %714 = vmatpush1.msra.mxu0 0.0
    %715 = vmatprep.subr.mxu0 0.0
    %716 = vmatpush1.msra.mxu0 0.0
    %717 = vmatprep.subr.mxu0 0.0
    %718 = vmatpush1.msra.mxu0 0.0
    %719 = vmatprep.subr.mxu0 0.0
    %720 = vmatpush1.msra.mxu0 0.0
    %721 = vmatprep.subr.mxu0 0.0
    %722 = vmatpush1.msra.mxu0 0.0
    %723 = vmatprep.subr.mxu0 0.0
    %724 = vmatpush1.msra.mxu0 0.0
    %725 = vmatprep.subr.mxu0 0.0
    %726 = vmatpush1.msra.mxu0 0.0
    %727 = vmatprep.subr.mxu0 0.0
    %728 = vmatpush1.msra.mxu0 0.0
    %729 = vmatprep.subr.mxu0 0.0
    %730 = vmatpush1.msra.mxu0 0.0
    %731 = vmatprep.subr.mxu0 0.0
    %732 = vmatpush1.msra.mxu0 0.0
    %733 = vmatprep.subr.mxu0 0.0
    %734 = vmatpush1.msra.mxu0 0.0
    %735 = vmatprep.subr.mxu0 0.0
    %736 = vmatpush1.msra.mxu0 0.0
    %737 = vmatprep.subr.mxu0 0.0
    %738 = vmatpush1.msra.mxu0 %v184
    %739 = vmatprep.subr.mxu0 0.0
    %740 = vmatpush1.msra.mxu0 %v183
    %741 = vmatprep.subr.mxu0 0.0
    %742 = vmatpush1.msra.mxu0 %v182
    %743 = vmatprep.subr.mxu0 0.0
    %744 = vmatpush1.msra.mxu0 %v181
    %745 = vmatprep.subr.mxu0 0.0
    %746 = vmatpush2.msra.mxu0 0.0
    %747 = vmatprep.subr.mxu0 0.0
    %748 = vmatpush2.msra.mxu0 0.0
    %749 = vmatprep.subr.mxu0 0.0
    %750 = vmatpush2.msra.mxu0 0.0
    %751 = vmatprep.subr.mxu0 0.0
    %752 = vmatpush2.msra.mxu0 0.0
    %753 = vmatprep.subr.mxu0 0.0
    %754 = vmatpush2.msra.mxu0 0.0
    %755 = vmatprep.subr.mxu0 0.0
    %756 = vmatpush2.msra.mxu0 0.0
    %757 = vmatprep.subr.mxu0 0.0
    %758 = vmatpush2.msra.mxu0 0.0
    %759 = vmatprep.subr.mxu0 0.0
    %760 = vmatpush2.msra.mxu0 0.0
    %761 = vmatprep.subr.mxu0 0.0
    %762 = vmatpush2.msra.mxu0 0.0
    %763 = vmatprep.subr.mxu0 0.0
    %764 = vmatpush2.msra.mxu0 0.0
    %765 = vmatprep.subr.mxu0 0.0
    %766 = vmatpush2.msra.mxu0 0.0
    %767 = vmatprep.subr.mxu0 0.0
    %768 = vmatpush2.msra.mxu0 0.0
    %769 = vmatprep.subr.mxu0 0.0
    %770 = vmatpush2.msra.mxu0 0.0
    %771 = vmatprep.subr.mxu0 0.0
    %772 = vmatpush2.msra.mxu0 0.0
    %773 = vmatprep.subr.mxu0 0.0
    %774 = vmatpush2.msra.mxu0 0.0
    %775 = vmatprep.subr.mxu0 0.0
    %776 = vmatpush2.msra.mxu0 0.0
    %777 = vmatprep.mubr.f32.mxu0 0.0
    %778 = vmatmul.mubr.f32.gmra.mxu0 %v711
    %v779 = vpop.f32.mrf.mxu0
    %v780 = vadd.f32 0.0, %v779
    %v781 = vpop.f32.mrf.mxu0
    %782 = vdwg.mxu0
    %v783 = vadd.f32 %v710, %v780
    %v784 = vxor.u32 %v783, 2147483648
    %v785 = vmul.f32 %v784, 1.442695
    %v786 = vpow.pop %v785
    %v787 = vadd.f32 %v786, 1.0
    %v788 = vrcp.pop %v787
    %v789 = vmul.f32 1.0, %v788
    %v790 = vtanh.pop %v783
    %v791 = vmul.f32 %v789, %v696
    %793 = vrot.lane.b32.xlu0 %v790, 32
    %v794 = vpop.permute.xlu0 %793
    %v796 = vmul.f32 %v789, %v794
    %798 = vrot.lane.b32.xlu0 %v796, 32
    %v799 = vpop.permute.xlu0 %798
    %v801 = vadd.f32 %v791, %v799
    %v802 = vtanh.pop %v801
    %804 = vrot.lane.b32.xlu0 %v802, 32
    %v805 = vpop.permute.xlu0 %804
    %v807 = vmul.f32 %v789, %v805
    %809 = vrot.lane.b32.xlu0 %v807, 64
    %v810 = vpop.permute.xlu0 %809
    %s812 = scalar_lea.vmem [#allocation3], 40
    %813 = vst.msk [vmem:[%s812] sm:$0xff] %vm43, %v810
    %s814 = scalar_lea.vmem [#allocation2], 48
    %v815 = vld [vmem:[%s814] sm:$0xff]
    %v816 = vsel %vm43, %v810, 0
    %818 = vmatprep.subr.mxu0 0.0
    %819 = vmatpush1.msra.mxu0 0.0
    %820 = vmatprep.subr.mxu0 0.0
    %821 = vmatpush1.msra.mxu0 0.0
    %822 = vmatprep.subr.mxu0 0.0
    %823 = vmatpush1.msra.mxu0 0.0
    %824 = vmatprep.subr.mxu0 0.0
    %825 = vmatpush1.msra.mxu0 0.0
    %826 = vmatprep.subr.mxu0 0.0
    %827 = vmatpush1.msra.mxu0 0.0
    %828 = vmatprep.subr.mxu0 0.0
    %829 = vmatpush1.msra.mxu0 0.0
    %830 = vmatprep.subr.mxu0 0.0
    %831 = vmatpush1.msra.mxu0 0.0
    %832 = vmatprep.subr.mxu0 0.0
    %833 = vmatpush1.msra.mxu0 0.0
    %834 = vmatprep.subr.mxu0 0.0
    %835 = vmatpush1.msra.mxu0 0.0
    %836 = vmatprep.subr.mxu0 0.0
    %837 = vmatpush1.msra.mxu0 0.0
    %838 = vmatprep.subr.mxu0 0.0
    %839 = vmatpush1.msra.mxu0 0.0
    %840 = vmatprep.subr.mxu0 0.0
    %841 = vmatpush1.msra.mxu0 0.0
    %842 = vmatprep.subr.mxu0 0.0
    %843 = vmatpush1.msra.mxu0 %v184
    %844 = vmatprep.subr.mxu0 0.0
    %845 = vmatpush1.msra.mxu0 %v183
    %846 = vmatprep.subr.mxu0 0.0
    %847 = vmatpush1.msra.mxu0 %v182
    %848 = vmatprep.subr.mxu0 0.0
    %849 = vmatpush1.msra.mxu0 %v181
    %850 = vmatprep.subr.mxu0 0.0
    %851 = vmatpush2.msra.mxu0 0.0
    %852 = vmatprep.subr.mxu0 0.0
    %853 = vmatpush2.msra.mxu0 0.0
    %854 = vmatprep.subr.mxu0 0.0
    %855 = vmatpush2.msra.mxu0 0.0
    %856 = vmatprep.subr.mxu0 0.0
    %857 = vmatpush2.msra.mxu0 0.0
    %858 = vmatprep.subr.mxu0 0.0
    %859 = vmatpush2.msra.mxu0 0.0
    %860 = vmatprep.subr.mxu0 0.0
    %861 = vmatpush2.msra.mxu0 0.0
    %862 = vmatprep.subr.mxu0 0.0
    %863 = vmatpush2.msra.mxu0 0.0
    %864 = vmatprep.subr.mxu0 0.0
    %865 = vmatpush2.msra.mxu0 0.0
    %866 = vmatprep.subr.mxu0 0.0
    %867 = vmatpush2.msra.mxu0 0.0
    %868 = vmatprep.subr.mxu0 0.0
    %869 = vmatpush2.msra.mxu0 0.0
    %870 = vmatprep.subr.mxu0 0.0
    %871 = vmatpush2.msra.mxu0 0.0
    %872 = vmatprep.subr.mxu0 0.0
    %873 = vmatpush2.msra.mxu0 0.0
    %874 = vmatprep.subr.mxu0 0.0
    %875 = vmatpush2.msra.mxu0 0.0
    %876 = vmatprep.subr.mxu0 0.0
    %877 = vmatpush2.msra.mxu0 0.0
    %878 = vmatprep.subr.mxu0 0.0
    %879 = vmatpush2.msra.mxu0 0.0
    %880 = vmatprep.subr.mxu0 0.0
    %881 = vmatpush2.msra.mxu0 0.0
    %882 = vmatprep.mubr.f32.mxu0 0.0
    %883 = vmatmul.mubr.f32.gmra.mxu0 %v816
    %v884 = vpop.f32.mrf.mxu0
    %v885 = vadd.f32 0.0, %v884
    %v886 = vpop.f32.mrf.mxu0
    %887 = vdwg.mxu0
    %v888 = vadd.f32 %v815, %v885
    %v889 = vxor.u32 %v888, 2147483648
    %v890 = vmul.f32 %v889, 1.442695
    %v891 = vpow.pop %v890
    %v892 = vadd.f32 %v891, 1.0
    %v893 = vrcp.pop %v892
    %v894 = vmul.f32 1.0, %v893
    %v895 = vtanh.pop %v888
    %v896 = vmul.f32 %v894, %v801
    %898 = vrot.lane.b32.xlu0 %v895, 32
    %v899 = vpop.permute.xlu0 %898
    %v901 = vmul.f32 %v894, %v899
    %903 = vrot.lane.b32.xlu0 %v901, 32
    %v904 = vpop.permute.xlu0 %903
    %v906 = vadd.f32 %v896, %v904
    %v907 = vtanh.pop %v906
    %909 = vrot.lane.b32.xlu0 %v907, 32
    %v910 = vpop.permute.xlu0 %909
    %v912 = vmul.f32 %v894, %v910
    %914 = vrot.lane.b32.xlu0 %v912, 64
    %v915 = vpop.permute.xlu0 %914
    %s917 = scalar_lea.vmem [#allocation3], 48
    %918 = vst.msk [vmem:[%s917] sm:$0xff] %vm43, %v915
    %s919 = scalar_lea.vmem [#allocation2], 56
    %v920 = vld [vmem:[%s919] sm:$0xff]
    %v921 = vsel %vm43, %v915, 0
    %923 = vmatprep.subr.mxu0 0.0
    %924 = vmatpush1.msra.mxu0 0.0
    %925 = vmatprep.subr.mxu0 0.0
    %926 = vmatpush1.msra.mxu0 0.0
    %927 = vmatprep.subr.mxu0 0.0
    %928 = vmatpush1.msra.mxu0 0.0
    %929 = vmatprep.subr.mxu0 0.0
    %930 = vmatpush1.msra.mxu0 0.0
    %931 = vmatprep.subr.mxu0 0.0
    %932 = vmatpush1.msra.mxu0 0.0
    %933 = vmatprep.subr.mxu0 0.0
    %934 = vmatpush1.msra.mxu0 0.0
    %935 = vmatprep.subr.mxu0 0.0
    %936 = vmatpush1.msra.mxu0 0.0
    %937 = vmatprep.subr.mxu0 0.0
    %938 = vmatpush1.msra.mxu0 0.0
    %939 = vmatprep.subr.mxu0 0.0
    %940 = vmatpush1.msra.mxu0 0.0
    %941 = vmatprep.subr.mxu0 0.0
    %942 = vmatpush1.msra.mxu0 0.0
    %943 = vmatprep.subr.mxu0 0.0
    %944 = vmatpush1.msra.mxu0 0.0
    %945 = vmatprep.subr.mxu0 0.0
    %946 = vmatpush1.msra.mxu0 0.0
    %947 = vmatprep.subr.mxu0 0.0
    %948 = vmatpush1.msra.mxu0 %v184
    %949 = vmatprep.subr.mxu0 0.0
    %950 = vmatpush1.msra.mxu0 %v183
    %951 = vmatprep.subr.mxu0 0.0
    %952 = vmatpush1.msra.mxu0 %v182
    %953 = vmatprep.subr.mxu0 0.0
    %954 = vmatpush1.msra.mxu0 %v181
    %955 = vmatprep.subr.mxu0 0.0
    %956 = vmatpush2.msra.mxu0 0.0
    %957 = vmatprep.subr.mxu0 0.0
    %958 = vmatpush2.msra.mxu0 0.0
    %959 = vmatprep.subr.mxu0 0.0
    %960 = vmatpush2.msra.mxu0 0.0
    %961 = vmatprep.subr.mxu0 0.0
    %962 = vmatpush2.msra.mxu0 0.0
    %963 = vmatprep.subr.mxu0 0.0
    %964 = vmatpush2.msra.mxu0 0.0
    %965 = vmatprep.subr.mxu0 0.0
    %966 = vmatpush2.msra.mxu0 0.0
    %967 = vmatprep.subr.mxu0 0.0
    %968 = vmatpush2.msra.mxu0 0.0
    %969 = vmatprep.subr.mxu0 0.0
    %970 = vmatpush2.msra.mxu0 0.0
    %971 = vmatprep.subr.mxu0 0.0
    %972 = vmatpush2.msra.mxu0 0.0
    %973 = vmatprep.subr.mxu0 0.0
    %974 = vmatpush2.msra.mxu0 0.0
    %975 = vmatprep.subr.mxu0 0.0
    %976 = vmatpush2.msra.mxu0 0.0
    %977 = vmatprep.subr.mxu0 0.0
    %978 = vmatpush2.msra.mxu0 0.0
    %979 = vmatprep.subr.mxu0 0.0
    %980 = vmatpush2.msra.mxu0 0.0
    %981 = vmatprep.subr.mxu0 0.0
    %982 = vmatpush2.msra.mxu0 0.0
    %983 = vmatprep.subr.mxu0 0.0
    %984 = vmatpush2.msra.mxu0 0.0
    %985 = vmatprep.subr.mxu0 0.0
    %986 = vmatpush2.msra.mxu0 0.0
    %987 = vmatprep.mubr.f32.mxu0 0.0
    %988 = vmatmul.mubr.f32.gmra.mxu0 %v921
    %v989 = vpop.f32.mrf.mxu0
    %v990 = vadd.f32 0.0, %v989
    %v991 = vpop.f32.mrf.mxu0
    %992 = vdwg.mxu0
    %v993 = vadd.f32 %v920, %v990
    %v994 = vxor.u32 %v993, 2147483648
    %v995 = vmul.f32 %v994, 1.442695
    %v996 = vpow.pop %v995
    %v997 = vadd.f32 %v996, 1.0
    %v998 = vrcp.pop %v997
    %v999 = vmul.f32 1.0, %v998
    %v1000 = vtanh.pop %v993
    %v1001 = vmul.f32 %v999, %v906
    %1003 = vrot.lane.b32.xlu0 %v1000, 32
    %v1004 = vpop.permute.xlu0 %1003
    %v1006 = vmul.f32 %v999, %v1004
    %1008 = vrot.lane.b32.xlu0 %v1006, 32
    %v1009 = vpop.permute.xlu0 %1008
    %v1011 = vadd.f32 %v1001, %v1009
    %v1012 = vtanh.pop %v1011
    %1014 = vrot.lane.b32.xlu0 %v1012, 32
    %v1015 = vpop.permute.xlu0 %1014
    %v1017 = vmul.f32 %v999, %v1015
    %1019 = vrot.lane.b32.xlu0 %v1017, 64
    %v1020 = vpop.permute.xlu0 %1019
    %s1022 = scalar_lea.vmem [#allocation3], 56
    %1023 = vst.msk [vmem:[%s1022] sm:$0xff] %vm43, %v1020
    %v1024 = vld [vmem:[#allocation3] sm:$0xff]
    %v1025 = vld [vmem:[#allocation3 + $0x8] sm:$0xff]
    %v1026 = vld [vmem:[#allocation3 + $0x10] sm:$0xff]
    %v1027 = vld [vmem:[#allocation3 + $0x18] sm:$0xff]
    %v1028 = vld [vmem:[#allocation3 + $0x20] sm:$0xff]
    %v1029 = vld [vmem:[#allocation3 + $0x28] sm:$0xff]
    %v1030 = vld [vmem:[#allocation3 + $0x30] sm:$0xff]
    %v1031 = vld [vmem:[#allocation3 + $0x38] sm:$0xff]
    %v1032 = vld [vmem:[%s4] sm:$0xff]
    %v1033 = vld [vmem:[%s4 + $0x8] sm:$0xff]
    %v1034 = vld [vmem:[%s4 + $0x10] sm:$0xff]
    %v1035 = vld [vmem:[%s4 + $0x18] sm:$0xff]
    %v1036 = vld [vmem:[%s5] sm:$0x1]
    %v1038 = vlaneseq
    %v1039 = vshrl.u32 %v1038, 7
    %v1040 = vsub.s32 0, %v1039
    %v1041 = vrot.slane %v1036, %v1040
    %v1044 = vsel %vm43, %v1024, 0
    %v1047 = vsel %vm43, %v1025, 0
    %v1050 = vsel %vm43, %v1026, 0
    %v1053 = vsel %vm43, %v1027, 0
    %v1056 = vsel %vm43, %v1028, 0
    %v1059 = vsel %vm43, %v1029, 0
    %v1062 = vsel %vm43, %v1030, 0
    %v1065 = vsel %vm43, %v1031, 0
    %1067 = vmatprep.subr.mxu0 0.0
    %1068 = vmatpush1.msra.mxu0 0.0
    %1069 = vmatprep.subr.mxu0 0.0
    %1070 = vmatpush1.msra.mxu0 0.0
    %1071 = vmatprep.subr.mxu0 0.0
    %1072 = vmatpush1.msra.mxu0 0.0
    %1073 = vmatprep.subr.mxu0 0.0
    %1074 = vmatpush1.msra.mxu0 0.0
    %1075 = vmatprep.subr.mxu0 0.0
    %1076 = vmatpush1.msra.mxu0 0.0
    %1077 = vmatprep.subr.mxu0 0.0
    %1078 = vmatpush1.msra.mxu0 0.0
    %1079 = vmatprep.subr.mxu0 0.0
    %1080 = vmatpush1.msra.mxu0 0.0
    %1081 = vmatprep.subr.mxu0 0.0
    %1082 = vmatpush1.msra.mxu0 0.0
    %1083 = vmatprep.subr.mxu0 0.0
    %1084 = vmatpush1.msra.mxu0 0.0
    %1085 = vmatprep.subr.mxu0 0.0
    %1086 = vmatpush1.msra.mxu0 0.0
    %1087 = vmatprep.subr.mxu0 0.0
    %1088 = vmatpush1.msra.mxu0 0.0
    %1089 = vmatprep.subr.mxu0 0.0
    %1090 = vmatpush1.msra.mxu0 0.0
    %1091 = vmatprep.subr.mxu0 0.0
    %1092 = vmatpush1.msra.mxu0 %v1035
    %1093 = vmatprep.subr.mxu0 0.0
    %1094 = vmatpush1.msra.mxu0 %v1034
    %1095 = vmatprep.subr.mxu0 0.0
    %1096 = vmatpush1.msra.mxu0 %v1033
    %1097 = vmatprep.subr.mxu0 0.0
    %1098 = vmatpush1.msra.mxu0 %v1032
    %1099 = vmatprep.subr.mxu0 0.0
    %1100 = vmatpush2.msra.mxu0 0.0
    %1101 = vmatprep.subr.mxu0 0.0
    %1102 = vmatpush2.msra.mxu0 0.0
    %1103 = vmatprep.subr.mxu0 0.0
    %1104 = vmatpush2.msra.mxu0 0.0
    %1105 = vmatprep.subr.mxu0 0.0
    %1106 = vmatpush2.msra.mxu0 0.0
    %1107 = vmatprep.subr.mxu0 0.0
    %1108 = vmatpush2.msra.mxu0 0.0
    %1109 = vmatprep.subr.mxu0 0.0
    %1110 = vmatpush2.msra.mxu0 0.0
    %1111 = vmatprep.subr.mxu0 0.0
    %1112 = vmatpush2.msra.mxu0 0.0
    %1113 = vmatprep.subr.mxu0 0.0
    %1114 = vmatpush2.msra.mxu0 0.0
    %1115 = vmatprep.subr.mxu0 0.0
    %1116 = vmatpush2.msra.mxu0 0.0
    %1117 = vmatprep.subr.mxu0 0.0
    %1118 = vmatpush2.msra.mxu0 0.0
    %1119 = vmatprep.subr.mxu0 0.0
    %1120 = vmatpush2.msra.mxu0 0.0
    %1121 = vmatprep.subr.mxu0 0.0
    %1122 = vmatpush2.msra.mxu0 0.0
    %1123 = vmatprep.subr.mxu0 0.0
    %1124 = vmatpush2.msra.mxu0 0.0
    %1125 = vmatprep.subr.mxu0 0.0
    %1126 = vmatpush2.msra.mxu0 0.0
    %1127 = vmatprep.subr.mxu0 0.0
    %1128 = vmatpush2.msra.mxu0 0.0
    %1129 = vmatprep.subr.mxu0 0.0
    %1130 = vmatpush2.msra.mxu0 0.0
    %1131 = vmatprep.mubr.f32.mxu0 0.0
    %1132 = vmatmul.mubr.f32.gmra.mxu0 %v1044
    %v1133 = vpop.f32.mrf.mxu0
    %v1134 = vadd.f32 %v1041, %v1133
    %v1135 = vpop.f32.mrf.mxu0
    %1136 = vmatprep.mubr.f32.mxu0 0.0
    %1137 = vmatmul.mubr.f32.gmra.mxu0 %v1047
    %v1138 = vpop.f32.mrf.mxu0
    %v1139 = vadd.f32 %v1041, %v1138
    %v1140 = vpop.f32.mrf.mxu0
    %1141 = vmatprep.mubr.f32.mxu0 0.0
    %1142 = vmatmul.mubr.f32.gmra.mxu0 %v1050
    %v1143 = vpop.f32.mrf.mxu0
    %v1144 = vadd.f32 %v1041, %v1143
    %v1145 = vpop.f32.mrf.mxu0
    %1146 = vmatprep.mubr.f32.mxu0 0.0
    %1147 = vmatmul.mubr.f32.gmra.mxu0 %v1053
    %v1148 = vpop.f32.mrf.mxu0
    %v1149 = vadd.f32 %v1041, %v1148
    %v1150 = vpop.f32.mrf.mxu0
    %1151 = vmatprep.mubr.f32.mxu0 0.0
    %1152 = vmatmul.mubr.f32.gmra.mxu0 %v1056
    %v1153 = vpop.f32.mrf.mxu0
    %v1154 = vadd.f32 %v1041, %v1153
    %v1155 = vpop.f32.mrf.mxu0
    %1156 = vmatprep.mubr.f32.mxu0 0.0
    %1157 = vmatmul.mubr.f32.gmra.mxu0 %v1059
    %v1158 = vpop.f32.mrf.mxu0
    %v1159 = vadd.f32 %v1041, %v1158
    %v1160 = vpop.f32.mrf.mxu0
    %1161 = vmatprep.mubr.f32.mxu0 0.0
    %1162 = vmatmul.mubr.f32.gmra.mxu0 %v1062
    %v1163 = vpop.f32.mrf.mxu0
    %v1164 = vadd.f32 %v1041, %v1163
    %v1165 = vpop.f32.mrf.mxu0
    %1166 = vmatprep.mubr.f32.mxu0 0.0
    %1167 = vmatmul.mubr.f32.gmra.mxu0 %v1065
    %v1168 = vpop.f32.mrf.mxu0
    %v1169 = vadd.f32 %v1041, %v1168
    %v1170 = vpop.f32.mrf.mxu0
    %1171 = vdwg.mxu0
    %1172 = vmax.xlane.f32.xlu0 %v1134
    %v1173 = vpop.xlane.xlu0 %1172
    %1174 = vmax.xlane.f32.xlu0 %v1139
    %v1175 = vpop.xlane.xlu0 %1174
    %1176 = vmax.xlane.f32.xlu0 %v1144
    %v1177 = vpop.xlane.xlu0 %1176
    %1178 = vmax.xlane.f32.xlu0 %v1149
    %v1179 = vpop.xlane.xlu0 %1178
    %1180 = vmax.xlane.f32.xlu0 %v1154
    %v1181 = vpop.xlane.xlu0 %1180
    %1182 = vmax.xlane.f32.xlu0 %v1159
    %v1183 = vpop.xlane.xlu0 %1182
    %1184 = vmax.xlane.f32.xlu0 %v1164
    %v1185 = vpop.xlane.xlu0 %1184
    %1186 = vmax.xlane.f32.xlu0 %v1169
    %v1187 = vpop.xlane.xlu0 %1186
    %v1188 = vsub.f32 %v1134, %v1173
    %v1189 = vsub.f32 %v1139, %v1175
    %v1190 = vsub.f32 %v1144, %v1177
    %v1191 = vsub.f32 %v1149, %v1179
    %v1192 = vsub.f32 %v1154, %v1181
    %v1193 = vsub.f32 %v1159, %v1183
    %v1194 = vsub.f32 %v1164, %v1185
    %v1195 = vsub.f32 %v1169, %v1187
    %v1196 = vmul.f32 %v1188, 1.442695
    %v1197 = vpow.pop %v1196
    %v1198 = vmul.f32 %v1189, 1.442695
    %v1199 = vpow.pop %v1198
    %v1200 = vmul.f32 %v1190, 1.442695
    %v1201 = vpow.pop %v1200
    %v1202 = vmul.f32 %v1191, 1.442695
    %v1203 = vpow.pop %v1202
    %v1204 = vmul.f32 %v1192, 1.442695
    %v1205 = vpow.pop %v1204
    %v1206 = vmul.f32 %v1193, 1.442695
    %v1207 = vpow.pop %v1206
    %v1208 = vmul.f32 %v1194, 1.442695
    %v1209 = vpow.pop %v1208
    %v1210 = vmul.f32 %v1195, 1.442695
    %v1211 = vpow.pop %v1210
    %1212 = vadd.xlane.f32.xlu0 %v1197
    %v1213 = vpop.xlane.xlu0 %1212
    %1214 = vadd.xlane.f32.xlu0 %v1199
    %v1215 = vpop.xlane.xlu0 %1214
    %1216 = vadd.xlane.f32.xlu0 %v1201
    %v1217 = vpop.xlane.xlu0 %1216
    %1218 = vadd.xlane.f32.xlu0 %v1203
    %v1219 = vpop.xlane.xlu0 %1218
    %1220 = vadd.xlane.f32.xlu0 %v1205
    %v1221 = vpop.xlane.xlu0 %1220
    %1222 = vadd.xlane.f32.xlu0 %v1207
    %v1223 = vpop.xlane.xlu0 %1222
    %1224 = vadd.xlane.f32.xlu0 %v1209
    %v1225 = vpop.xlane.xlu0 %1224
    %1226 = vadd.xlane.f32.xlu0 %v1211
    %v1227 = vpop.xlane.xlu0 %1226
    %v1228 = vlog2.pop %v1213
    %v1229 = vmul.f32 %v1228, 0.6931472
    %v1230 = vlog2.pop %v1215
    %v1231 = vmul.f32 %v1230, 0.6931472
    %v1232 = vlog2.pop %v1217
    %v1233 = vmul.f32 %v1232, 0.6931472
    %v1234 = vlog2.pop %v1219
    %v1235 = vmul.f32 %v1234, 0.6931472
    %v1236 = vlog2.pop %v1221
    %v1237 = vmul.f32 %v1236, 0.6931472
    %v1238 = vlog2.pop %v1223
    %v1239 = vmul.f32 %v1238, 0.6931472
    %v1240 = vlog2.pop %v1225
    %v1241 = vmul.f32 %v1240, 0.6931472
    %v1242 = vlog2.pop %v1227
    %v1243 = vmul.f32 %v1242, 0.6931472
    %v1244 = vsub.f32 %v1188, %v1229
    %v1245 = vsub.f32 %v1189, %v1231
    %v1246 = vsub.f32 %v1190, %v1233
    %v1247 = vsub.f32 %v1191, %v1235
    %v1248 = vsub.f32 %v1192, %v1237
    %v1249 = vsub.f32 %v1193, %v1239
    %v1250 = vsub.f32 %v1194, %v1241
    %v1251 = vsub.f32 %v1195, %v1243
    %1252 = vst [vmem:[#allocation4] sm:$0xff] %v1244
    %1253 = vst [vmem:[#allocation4 + $0x8] sm:$0xff] %v1245
    %1254 = vst [vmem:[#allocation4 + $0x10] sm:$0xff] %v1246
    %1255 = vst [vmem:[#allocation4 + $0x18] sm:$0xff] %v1247
    %1256 = vst [vmem:[#allocation4 + $0x20] sm:$0xff] %v1248
    %1257 = vst [vmem:[#allocation4 + $0x28] sm:$0xff] %v1249
    %1258 = vst [vmem:[#allocation4 + $0x30] sm:$0xff] %v1250
    %1259 = vst [vmem:[#allocation4 + $0x38] sm:$0xff] %v1251
    // Predicated region
    $region26: #{tpu_custom_call.1} parent=1 // pred_check
      _
    $region27: #{tpu_custom_call.1} parent=1 // pred_check_branch
      %1261 = sbr.rel (0) target = $region29
    $region28: #{tpu_custom_call.1} parent=1 // pred_region
      %s1263 = ssub.s32 1024, 1024
      %1264 = vsyncadd [#allocation5], %s1263
      %s1265 = sshll.u32 [#allocation4], 4
      %s1266 = int_to_ptr.vmem [resolvable:$true] %s1265
      %1271 = dma.vmem_to_hbm [thread:$0]  %s1266, 1024, %s6, [#allocation5], 128, 128, 8
    $region29: #{tpu_custom_call.1} parent=1 // pred_fallthru
      _
    // Predicated region
    $region30: #{tpu_custom_call.1} parent=1 // pred_check
      _
    $region31: #{tpu_custom_call.1} parent=1 // pred_check_branch
      %1273 = sbr.rel (0) target = $region33
    $region32: #{tpu_custom_call.1} parent=1 // pred_region
      %1274 = dma.done [#allocation5], 1024
    $region33: #{tpu_custom_call.1} parent=1 // pred_fallthru
      _
    %1275 = vsyncpa [#allocation5], 1

</llo_original>
